<compile_context>
chip_gen: v7x
topology: tpu7x:2x2x1
jax: 0.10.0
libtpu: 0.0.40
codegen_flags: <defaults>
</compile_context>

<pallas_src>
import functools

import jax
import jax.numpy as jnp
from jax.experimental import pallas as pl
from jax.experimental.pallas import tpu as pltpu


HIDDEN = 500
HIDDEN_PAD = 512      # 500 rounded up to a multiple of 128 (lane group)
HEAD_PAD = 128        # 2 * n_actions rounded up to a full lane group
LARGE_BLOCK = 1024    # batch block for large B (amortizes ~0.35us/step overhead)


def _round_up(v, m):
    return ((v + m - 1) // m) * m


def _tpu_num_tensorcores():
    """Best-effort host-side probe: 2 on v7x-style chips (2 TCs/chip), else 1."""
    try:
        kind = jax.devices()[0].device_kind.lower()
    except Exception:
        return 1
    return 2 if ("v7" in kind or "7x" in kind) else 1


_NUM_TC = _tpu_num_tensorcores()


def _actor_kernel(x_ref, w1_ref, b1_ref, w2_ref, b2_ref, wh_ref, bh_ref,
                  lo_ref, hi_ref, out_ref):
    bf16 = jnp.bfloat16

    # lin1 + ReLU: MXU in bf16 with f32 accumulation; bias + ReLU epilogue in
    # packed bf16 (VALU-slot relief on v6e/v7x; hidden under MXU slack on v5e).
    x = x_ref[...].astype(bf16)
    h1 = jnp.dot(x, w1_ref[...], preferred_element_type=jnp.float32)
    h1 = jnp.maximum(h1.astype(bf16) + b1_ref[...], 0)

    # lin2 + ReLU (h1 is already bf16 -> feeds the MXU directly).
    h2 = jnp.dot(h1, w2_ref[...], preferred_element_type=jnp.float32)
    h2 = jnp.maximum(h2.astype(bf16) + b2_ref[...], 0)

    # Fused heads: lanes [0, A) = mu, [A, 2A) = logstd, rest zero padding.
    # One lane-dense (block_b, 128) store.  Per-lane lo/hi bound vectors
    # (precomputed host-side) implement "clamp logstd only" as min(max(.)).
    head = jnp.dot(h2, wh_ref[...], preferred_element_type=jnp.float32)
    head = head + bh_ref[...]
    out_ref[...] = jnp.minimum(jnp.maximum(head, lo_ref[...]), hi_ref[...])


def init_actor_params(key, n_states, n_actions, hidden=HIDDEN):
    """PyTorch-Linear-like uniform init; weights stored (in, out), f32."""
    ks = jax.random.split(key, 8)

    def linear(kw, kb, fan_in, fan_out):
        bound = 1.0 / (float(fan_in) ** 0.5)
        w = jax.random.uniform(kw, (fan_in, fan_out), jnp.float32, -bound, bound)
        b = jax.random.uniform(kb, (fan_out,), jnp.float32, -bound, bound)
        return w, b

    w1, b1 = linear(ks[0], ks[1], n_states, hidden)
    w2, b2 = linear(ks[2], ks[3], hidden, hidden)
    wmu, bmu = linear(ks[4], ks[5], hidden, n_actions)
    wls, bls = linear(ks[6], ks[7], hidden, n_actions)
    return dict(w1=w1, b1=b1, w2=w2, b2=b2,
                wmu=wmu, bmu=bmu, wls=wls, bls=bls)


def prepare_actor_params(p, n_actions, hidden_pad=HIDDEN_PAD, head_pad=HEAD_PAD):
    """Pad hidden -> 512, fuse + lane-pad heads, bf16 weights/biases, lo/hi."""
    hidden = p["w1"].shape[1]
    dh = hidden_pad - hidden
    dhead = head_pad - 2 * n_actions
    assert dh >= 0 and dhead >= 0

    w1p = jnp.pad(p["w1"], ((0, 0), (0, dh)))
    b1p = jnp.pad(p["b1"].reshape(1, -1), ((0, 0), (0, dh)))
    w2p = jnp.pad(p["w2"], ((0, dh), (0, dh)))
    b2p = jnp.pad(p["b2"].reshape(1, -1), ((0, 0), (0, dh)))

    wh = jnp.concatenate([p["wmu"], p["wls"]], axis=1)            # (hidden, 2A)
    bh = jnp.concatenate([p["bmu"], p["bls"]], axis=0).reshape(1, -1)
    whp = jnp.pad(wh, ((0, dh), (0, dhead)))
    bhp = jnp.pad(bh, ((0, 0), (0, dhead)))

    # Per-lane clamp bounds: mu lanes unbounded, logstd lanes [-20, 2],
    # padding lanes unbounded (they are sliced off by the wrapper).
    inf = jnp.inf
    lo = jnp.concatenate([
        jnp.full((n_actions,), -inf, jnp.float32),
        jnp.full((n_actions,), -20.0, jnp.float32),
        jnp.full((dhead,), -inf, jnp.float32),
    ]).reshape(1, -1)
    hi = jnp.concatenate([
        jnp.full((n_actions,), inf, jnp.float32),
        jnp.full((n_actions,), 2.0, jnp.float32),
        jnp.full((dhead,), inf, jnp.float32),
    ]).reshape(1, -1)

    return dict(
        w1=w1p.astype(jnp.bfloat16), b1=b1p.astype(jnp.bfloat16),
        w2=w2p.astype(jnp.bfloat16), b2=b2p.astype(jnp.bfloat16),
        wh=whp.astype(jnp.bfloat16), bh=bhp.astype(jnp.float32),
        lo=lo, hi=hi,
    )


def _choose_batch_block(B):
    """Pick (block_b, padded_B).  block_b is a multiple of 8 (sublane)."""
    if _NUM_TC >= 2 and B > 8:
        # v7x: ensure >= 2 grid steps so the "parallel" axis feeds both TCs.
        block_b = min(LARGE_BLOCK, _round_up(-(-B // _NUM_TC), 8))
    elif B <= LARGE_BLOCK:
        block_b = _round_up(max(B, 8), 8)
    else:
        block_b = LARGE_BLOCK
    return block_b, _round_up(B, block_b)


@functools.partial(jax.jit, static_argnums=(2,))
def actor_forward(x, prepared, n_actions):
    """Actor forward pass as one Pallas kernel.

    x: (B, n_states) float32.
    prepared: output of prepare_actor_params (bf16 weights/biases, lo/hi).
    Returns (mu, logstd), each (B, n_actions) float32, logstd clamped [-20, 2].
    """
    B, n_states = x.shape
    head_pad = prepared["wh"].shape[1]

    block_b, b_pad = _choose_batch_block(B)
    if b_pad != B:
        x = jnp.pad(x, ((0, b_pad - B), (0, 0)))   # padded rows -> discarded

    grid = (b_pad // block_b,)

    w1, b1 = prepared["w1"], prepared["b1"]
    w2, b2 = prepared["w2"], prepared["b2"]
    wh, bh = prepared["wh"], prepared["bh"]
    lo, hi = prepared["lo"], prepared["hi"]

    const = lambda i: (0, 0)  # weights/biases: full-array block, VMEM-resident
    in_specs = [
        pl.BlockSpec((block_b, n_states), lambda i: (i, 0)),
        pl.BlockSpec(w1.shape, const),
        pl.BlockSpec(b1.shape, const),
        pl.BlockSpec(w2.shape, const),
        pl.BlockSpec(b2.shape, const),
        pl.BlockSpec(wh.shape, const),
        pl.BlockSpec(bh.shape, const),
        pl.BlockSpec(lo.shape, const),
        pl.BlockSpec(hi.shape, const),
    ]
    out_specs = pl.BlockSpec((block_b, head_pad), lambda i: (i, 0))

    head = pl.pallas_call(
        _actor_kernel,
        out_shape=jax.ShapeDtypeStruct((b_pad, head_pad), jnp.float32),
        grid=grid,
        in_specs=in_specs,
        out_specs=out_specs,
        compiler_params=pltpu.CompilerParams(
            dimension_semantics=("parallel",),
            vmem_limit_bytes=32 << 20,
        ),
    )(x, w1, b1, w2, b2, wh, bh, lo, hi)

    mu = head[:B, :n_actions]
    logstd = head[:B, n_actions:2 * n_actions]
    return mu, logstd


def actor_forward_ref_bf16(x, p):
    """Pure-JAX reference mirroring the kernel's bf16 quantization."""
    bf16 = jnp.bfloat16

    def mm(a, w):
        return jnp.dot(a.astype(bf16), w.astype(bf16),
                       preferred_element_type=jnp.float32)

    h1 = jnp.maximum(mm(x, p["w1"]).astype(bf16) + p["b1"].astype(bf16), 0)
    h2 = jnp.maximum(mm(h1, p["w2"]).astype(bf16) + p["b2"].astype(bf16), 0)
    mu = mm(h2, p["wmu"]) + p["bmu"]
    logstd = jnp.clip(mm(h2, p["wls"]) + p["bls"], -20.0, 2.0)
    return mu, logstd


# TODO(synk): log_prob / get_action (torch.distributions.Normal sampling and
# tanh-squashed log-density) are not part of forward() and are not implemented
# as Pallas kernels.


if __name__ == "__main__":
    key = jax.random.PRNGKey(0)
    k_params, k_x = jax.random.split(key)

    batch, n_states, n_actions = 2, 32, 8
    raw = init_actor_params(k_params, n_states, n_actions, hidden=HIDDEN)
    prepared = prepare_actor_params(raw, n_actions)
    x = jax.random.normal(k_x, (batch, n_states), jnp.float32)

    mu, logstd = actor_forward(x, prepared, n_actions)
    jax.block_until_ready((mu, logstd))

    mu_ref, logstd_ref = actor_forward_ref_bf16(x, raw)

    assert mu.shape == (batch, n_actions) and logstd.shape == (batch, n_actions)
    assert jnp.allclose(mu, mu_ref, atol=1e-2, rtol=1e-2), (
        float(jnp.max(jnp.abs(mu - mu_ref))))
    assert jnp.allclose(logstd, logstd_ref, atol=1e-2, rtol=1e-2), (
        float(jnp.max(jnp.abs(logstd - logstd_ref))))
    assert float(logstd.max()) <= 2.0 and float(logstd.min()) >= -20.0

    print("KERNEL_OK")
</pallas_src>

<mosaic_0001>
module attributes {stable_mosaic.version = 11 : i64} {
  func.func @_actor_kernel(%arg0: i32, %arg1: memref<8x32xf32, #tpu.memory_space<vmem>>, %arg2: memref<32x512xbf16, #tpu.memory_space<vmem>>, %arg3: memref<1x512xbf16, #tpu.memory_space<vmem>>, %arg4: memref<512x512xbf16, #tpu.memory_space<vmem>>, %arg5: memref<1x512xbf16, #tpu.memory_space<vmem>>, %arg6: memref<512x128xbf16, #tpu.memory_space<vmem>>, %arg7: memref<1x128xf32, #tpu.memory_space<vmem>>, %arg8: memref<1x128xf32, #tpu.memory_space<vmem>>, %arg9: memref<1x128xf32, #tpu.memory_space<vmem>>, %arg10: memref<8x128xf32, #tpu.memory_space<vmem>>) attributes {dimension_semantics = [#tpu.dimension_semantics<parallel>], iteration_bounds = array<i64: 1>, scalar_prefetch = 0 : i64, scratch_operands = 0 : i64, tpu.core_type = #tpu.core_type<tc>, window_params = [{transform_indices = @transform_0, window_bounds = array<i64: 8, 32>}, {pipeline_mode = #tpu.pipeline_mode<synchronous>, transform_indices = @transform_1, window_bounds = array<i64: 32, 512>}, {pipeline_mode = #tpu.pipeline_mode<synchronous>, transform_indices = @transform_2, window_bounds = array<i64: 1, 512>}, {pipeline_mode = #tpu.pipeline_mode<synchronous>, transform_indices = @transform_3, window_bounds = array<i64: 512, 512>}, {pipeline_mode = #tpu.pipeline_mode<synchronous>, transform_indices = @transform_4, window_bounds = array<i64: 1, 512>}, {pipeline_mode = #tpu.pipeline_mode<synchronous>, transform_indices = @transform_5, window_bounds = array<i64: 512, 128>}, {pipeline_mode = #tpu.pipeline_mode<synchronous>, transform_indices = @transform_6, window_bounds = array<i64: 1, 128>}, {pipeline_mode = #tpu.pipeline_mode<synchronous>, transform_indices = @transform_7, window_bounds = array<i64: 1, 128>}, {pipeline_mode = #tpu.pipeline_mode<synchronous>, transform_indices = @transform_8, window_bounds = array<i64: 1, 128>}, {transform_indices = @transform_9, window_bounds = array<i64: 8, 128>}]} {
    %c0 = arith.constant 0 : index
    %c0_0 = arith.constant 0 : index
    %0 = vector.load %arg1[%c0, %c0_0] : memref<8x32xf32, #tpu.memory_space<vmem>>, vector<8x32xf32>
    %1 = arith.truncf %0 : vector<8x32xf32> to vector<8x32xbf16>
    %c0_1 = arith.constant 0 : index
    %c0_2 = arith.constant 0 : index
    %2 = vector.load %arg2[%c0_1, %c0_2] : memref<32x512xbf16, #tpu.memory_space<vmem>>, vector<32x512xbf16>
    %cst = arith.constant dense<0.000000e+00> : vector<8x512xf32>
    %3 = tpu.matmul %1, %2, %cst {dimension_numbers = #tpu.dot_dimension_numbers<[1], [0], [0], [1], [0, 0, 1, 1], [], []>} : vector<8x32xbf16>, vector<32x512xbf16>, vector<8x512xf32> -> vector<8x512xf32>
    %4 = arith.truncf %3 : vector<8x512xf32> to vector<8x512xbf16>
    %c0_3 = arith.constant 0 : index
    %c0_4 = arith.constant 0 : index
    %5 = vector.load %arg3[%c0_3, %c0_4] : memref<1x512xbf16, #tpu.memory_space<vmem>>, vector<1x512xbf16>
    %6 = vector.broadcast %5 : vector<1x512xbf16> to vector<8x512xbf16>
    %7 = arith.addf %4, %6 : vector<8x512xbf16>
    %cst_5 = arith.constant 0.000000e+00 : bf16
    %8 = vector.broadcast %cst_5 : bf16 to vector<8x512xbf16>
    %9 = arith.maximumf %7, %8 : vector<8x512xbf16>
    %c0_6 = arith.constant 0 : index
    %c0_7 = arith.constant 0 : index
    %10 = vector.load %arg4[%c0_6, %c0_7] : memref<512x512xbf16, #tpu.memory_space<vmem>>, vector<512x512xbf16>
    %cst_8 = arith.constant dense<0.000000e+00> : vector<8x512xf32>
    %11 = tpu.matmul %9, %10, %cst_8 {dimension_numbers = #tpu.dot_dimension_numbers<[1], [0], [0], [1], [0, 0, 1, 1], [], []>} : vector<8x512xbf16>, vector<512x512xbf16>, vector<8x512xf32> -> vector<8x512xf32>
    %12 = arith.truncf %11 : vector<8x512xf32> to vector<8x512xbf16>
    %c0_9 = arith.constant 0 : index
    %c0_10 = arith.constant 0 : index
    %13 = vector.load %arg5[%c0_9, %c0_10] : memref<1x512xbf16, #tpu.memory_space<vmem>>, vector<1x512xbf16>
    %14 = vector.broadcast %13 : vector<1x512xbf16> to vector<8x512xbf16>
    %15 = arith.addf %12, %14 : vector<8x512xbf16>
    %cst_11 = arith.constant 0.000000e+00 : bf16
    %16 = vector.broadcast %cst_11 : bf16 to vector<8x512xbf16>
    %17 = arith.maximumf %15, %16 : vector<8x512xbf16>
    %c0_12 = arith.constant 0 : index
    %c0_13 = arith.constant 0 : index
    %18 = vector.load %arg6[%c0_12, %c0_13] : memref<512x128xbf16, #tpu.memory_space<vmem>>, vector<512x128xbf16>
    %cst_14 = arith.constant dense<0.000000e+00> : vector<8x128xf32>
    %19 = tpu.matmul %17, %18, %cst_14 {dimension_numbers = #tpu.dot_dimension_numbers<[1], [0], [0], [1], [0, 0, 1, 1], [], []>} : vector<8x512xbf16>, vector<512x128xbf16>, vector<8x128xf32> -> vector<8x128xf32>
    %c0_15 = arith.constant 0 : index
    %c0_16 = arith.constant 0 : index
    %20 = vector.load %arg7[%c0_15, %c0_16] : memref<1x128xf32, #tpu.memory_space<vmem>>, vector<1x128xf32>
    %21 = vector.broadcast %20 : vector<1x128xf32> to vector<8x128xf32>
    %22 = arith.addf %19, %21 : vector<8x128xf32>
    %c0_17 = arith.constant 0 : index
    %c0_18 = arith.constant 0 : index
    %23 = vector.load %arg8[%c0_17, %c0_18] : memref<1x128xf32, #tpu.memory_space<vmem>>, vector<1x128xf32>
    %24 = vector.broadcast %23 : vector<1x128xf32> to vector<8x128xf32>
    %25 = arith.maximumf %22, %24 : vector<8x128xf32>
    %c0_19 = arith.constant 0 : index
    %c0_20 = arith.constant 0 : index
    %26 = vector.load %arg9[%c0_19, %c0_20] : memref<1x128xf32, #tpu.memory_space<vmem>>, vector<1x128xf32>
    %27 = vector.broadcast %26 : vector<1x128xf32> to vector<8x128xf32>
    %28 = arith.minimumf %25, %27 : vector<8x128xf32>
    %c0_21 = arith.constant 0 : index
    %c0_22 = arith.constant 0 : index
    %29 = vector.load %arg10[%c0_21, %c0_22] : memref<8x128xf32, #tpu.memory_space<vmem>>, vector<8x128xf32>
    tpu.vector_store %arg10[%c0_21, %c0_22], %28 {strides = array<i32>} : memref<8x128xf32, #tpu.memory_space<vmem>>, vector<8x128xf32>,
    return
  }
  func.func @transform_0(%arg0: i32) -> (i32, i32) {
    %c0_i32 = arith.constant 0 : i32
    %c0_i32_0 = arith.constant 0 : i32
    return %arg0, %c0_i32 : i32, i32
  }
  func.func @transform_1(%arg0: i32) -> (i32, i32) {
    %c0_i32 = arith.constant 0 : i32
    %c0_i32_0 = arith.constant 0 : i32
    %c0_i32_1 = arith.constant 0 : i32
    return %c0_i32, %c0_i32_0 : i32, i32
  }
  func.func @transform_2(%arg0: i32) -> (i32, i32) {
    %c0_i32 = arith.constant 0 : i32
    %c0_i32_0 = arith.constant 0 : i32
    %c0_i32_1 = arith.constant 0 : i32
    return %c0_i32, %c0_i32_0 : i32, i32
  }
  func.func @transform_3(%arg0: i32) -> (i32, i32) {
    %c0_i32 = arith.constant 0 : i32
    %c0_i32_0 = arith.constant 0 : i32
    %c0_i32_1 = arith.constant 0 : i32
    return %c0_i32, %c0_i32_0 : i32, i32
  }
  func.func @transform_4(%arg0: i32) -> (i32, i32) {
    %c0_i32 = arith.constant 0 : i32
    %c0_i32_0 = arith.constant 0 : i32
    %c0_i32_1 = arith.constant 0 : i32
    return %c0_i32, %c0_i32_0 : i32, i32
  }
  func.func @transform_5(%arg0: i32) -> (i32, i32) {
    %c0_i32 = arith.constant 0 : i32
    %c0_i32_0 = arith.constant 0 : i32
    %c0_i32_1 = arith.constant 0 : i32
    return %c0_i32, %c0_i32_0 : i32, i32
  }
  func.func @transform_6(%arg0: i32) -> (i32, i32) {
    %c0_i32 = arith.constant 0 : i32
    %c0_i32_0 = arith.constant 0 : i32
    %c0_i32_1 = arith.constant 0 : i32
    return %c0_i32, %c0_i32_0 : i32, i32
  }
  func.func @transform_7(%arg0: i32) -> (i32, i32) {
    %c0_i32 = arith.constant 0 : i32
    %c0_i32_0 = arith.constant 0 : i32
    %c0_i32_1 = arith.constant 0 : i32
    return %c0_i32, %c0_i32_0 : i32, i32
  }
  func.func @transform_8(%arg0: i32) -> (i32, i32) {
    %c0_i32 = arith.constant 0 : i32
    %c0_i32_0 = arith.constant 0 : i32
    %c0_i32_1 = arith.constant 0 : i32
    return %c0_i32, %c0_i32_0 : i32, i32
  }
  func.func @transform_9(%arg0: i32) -> (i32, i32) {
    %c0_i32 = arith.constant 0 : i32
    %c0_i32_0 = arith.constant 0 : i32
    return %arg0, %c0_i32 : i32, i32
  }
}

</mosaic_0001>

<llo_original>
// kernel: actor_forward.1
$region0: #{actor_forward.1}
  #allocation0 [shape = 'u32[]', space=smem, size = 0x4, offset = 0x4, fixed_abs, tag = 'smem constant byte address 0x4 - core index']
  #allocation1 [shape = 'u32[144,128]{1,0:T(1,128)}', space=vmem, size = 0x12000, scoped, tag = 'internal scratch']
  %s0 = inlined_call_operand.vmem [shape: f32[8,32], index: 0, kind: input, shape index: {}]
  %s1 = inlined_call_operand.hbm [shape: bf16[32,512], index: 1, kind: input, shape index: {}]
  %s2 = inlined_call_operand.vmem [shape: bf16[1,512], index: 2, kind: input, shape index: {}]
  %s3 = inlined_call_operand.hbm [shape: bf16[512,512], index: 3, kind: input, shape index: {}]
  %s4 = inlined_call_operand.vmem [shape: bf16[1,512], index: 4, kind: input, shape index: {}]
  %s5 = inlined_call_operand.hbm [shape: bf16[512,128], index: 5, kind: input, shape index: {}]
  %s6 = inlined_call_operand.vmem [shape: f32[1,128], index: 6, kind: input, shape index: {}]
  %s7 = inlined_call_operand.vmem [shape: f32[1,128], index: 7, kind: input, shape index: {}]
  %s8 = inlined_call_operand.vmem [shape: f32[1,128], index: 8, kind: input, shape index: {}]
  %s9 = inlined_call_operand.vmem [shape: f32[8,128], index: 9, kind: output, shape index: {}]
  %s10 = sld [smem:[#allocation0]]
  $region58: #{actor_forward.1} parent=0
    _
  %s12 = ssub.s32 1, %s10
  %s13 = scalar_select 0, %s12, %s10
  $region1: #{actor_forward.1} parent=0
    #allocation2 [shape = 'u8[32768]{0}', space=vmem, size = 0x8000, scoped, tag = 'input window, operand 1, single buffered']
    #allocation3 [shape = 's32[1]{0}', space=sflag, size = 0x4, scoped, tag = 'scoped memory for actor_forward.1']
    #allocation4 [shape = 'u8[524288]{0}', space=vmem, size = 0x80000, scoped, tag = 'input window, operand 3, single buffered']
    #allocation5 [shape = 's32[1]{0}', space=sflag, size = 0x4, scoped, tag = 'scoped memory for actor_forward.1']
    #allocation6 [shape = 'u8[131072]{0}', space=vmem, size = 0x20000, scoped, tag = 'input window, operand 5, single buffered']
    %14 = vsyncpa [#allocation3], 0
    %15 = vsyncpa [#allocation5], 0
    // Predicated region
    $region2: #{actor_forward.1} parent=1 // pred_check
      _
    $region3: #{actor_forward.1} parent=1 // pred_check_branch
      %17 = sbr.rel (0) target = $region5
    $region4: #{actor_forward.1} parent=1 // pred_region
      _
    $region5: #{actor_forward.1} parent=1 // pred_fallthru
      _
    // Predicated region
    $region6: #{actor_forward.1} parent=1 // pred_check
      _
    $region7: #{actor_forward.1} parent=1 // pred_check_branch
      %19 = sbr.rel (0) target = $region9
    $region8: #{actor_forward.1} parent=1 // pred_region
      %s21 = ssub.s32 1024, 1024
      %22 = vsyncadd [#allocation3], %s21
      %s23 = sshll.u32 [#allocation2], 4
      %s24 = int_to_ptr.vmem [resolvable:$true] %s23
      %29 = dma.hbm_to_vmem [thread:$0]  %s1, 1024, %s24, [#allocation3], 256, 256, 16
    $region9: #{actor_forward.1} parent=1 // pred_fallthru
      _
    // Predicated region
    $region10: #{actor_forward.1} parent=1 // pred_check
      _
    $region11: #{actor_forward.1} parent=1 // pred_check_branch
      %31 = sbr.rel (0) target = $region13
    $region12: #{actor_forward.1} parent=1 // pred_region
      _
    $region13: #{actor_forward.1} parent=1 // pred_fallthru
      _
    // Predicated region
    $region14: #{actor_forward.1} parent=1 // pred_check
      _
    $region15: #{actor_forward.1} parent=1 // pred_check_branch
      %33 = sbr.rel (0) target = $region17
    $region16: #{actor_forward.1} parent=1 // pred_region
      %s35 = ssub.s32 16384, 16384
      %36 = vsyncadd [#allocation5], %s35
      %s37 = sshll.u32 [#allocation4], 4
      %s38 = int_to_ptr.vmem [resolvable:$true] %s37
      %43 = dma.hbm_to_vmem [thread:$0]  %s3, 16384, %s38, [#allocation5], 256, 256, 16
    $region17: #{actor_forward.1} parent=1 // pred_fallthru
      _
    // Predicated region
    $region18: #{actor_forward.1} parent=1 // pred_check
      _
    $region19: #{actor_forward.1} parent=1 // pred_check_branch
      %45 = sbr.rel (0) target = $region21
    $region20: #{actor_forward.1} parent=1 // pred_region
      _
    $region21: #{actor_forward.1} parent=1 // pred_fallthru
      _
    // Predicated region
    $region22: #{actor_forward.1} parent=1 // pred_check
      _
    $region23: #{actor_forward.1} parent=1 // pred_check_branch
      %47 = sbr.rel (0) target = $region25
    $region24: #{actor_forward.1} parent=1 // pred_region
      %s49 = ssub.s32 4096, 4096
      %50 = vsyncadd [#allocation5], %s49
      %s51 = sshll.u32 [#allocation6], 4
      %s52 = int_to_ptr.vmem [resolvable:$true] %s51
      %57 = dma.hbm_to_vmem [thread:$0]  %s5, 4096, %s52, [#allocation5], 64, 64, 4
    $region25: #{actor_forward.1} parent=1 // pred_fallthru
      _
    // Predicated region
    $region26: #{actor_forward.1} parent=1 // pred_check
      _
    $region27: #{actor_forward.1} parent=1 // pred_check_branch
      %59 = sbr.rel (0) target = $region29
    $region28: #{actor_forward.1} parent=1 // pred_region
      _
    $region29: #{actor_forward.1} parent=1 // pred_fallthru
      _
    // Predicated region
    $region30: #{actor_forward.1} parent=1 // pred_check
      _
    $region31: #{actor_forward.1} parent=1 // pred_check_branch
      %61 = sbr.rel (0) target = $region33
    $region32: #{actor_forward.1} parent=1 // pred_region
      _
    $region33: #{actor_forward.1} parent=1 // pred_fallthru
      _
    // Predicated region
    $region34: #{actor_forward.1} parent=1 // pred_check
      _
    $region35: #{actor_forward.1} parent=1 // pred_check_branch
      %63 = sbr.rel (0) target = $region37
    $region36: #{actor_forward.1} parent=1 // pred_region
      _
    $region37: #{actor_forward.1} parent=1 // pred_fallthru
      _
    // Predicated region
    $region38: #{actor_forward.1} parent=1 // pred_check
      _
    $region39: #{actor_forward.1} parent=1 // pred_check_branch
      %65 = sbr.rel (0) target = $region41
    $region40: #{actor_forward.1} parent=1 // pred_region
      %66 = dma.done [#allocation3], 1024
    $region41: #{actor_forward.1} parent=1 // pred_fallthru
      _
    // Predicated region
    $region42: #{actor_forward.1} parent=1 // pred_check
      _
    $region43: #{actor_forward.1} parent=1 // pred_check_branch
      %68 = sbr.rel (0) target = $region45
    $region44: #{actor_forward.1} parent=1 // pred_region
      %69 = dma.done [#allocation5], 16384
    $region45: #{actor_forward.1} parent=1 // pred_fallthru
      _
    // Predicated region
    $region46: #{actor_forward.1} parent=1 // pred_check
      _
    $region47: #{actor_forward.1} parent=1 // pred_check_branch
      %71 = sbr.rel (0) target = $region49
    $region48: #{actor_forward.1} parent=1 // pred_region
      %72 = dma.done [#allocation5], 4096
    $region49: #{actor_forward.1} parent=1 // pred_fallthru
      _
    %v74 = vld [vmem:[%s0] sm:$0xff]
    %v75 = vpack.c.bf16 %v74, %v74
    %v76 = vld [vmem:[#allocation2] sm:$0xff]
    %v77 = vld [vmem:[#allocation2 + $0x8] sm:$0xff]
    %v78 = vld [vmem:[#allocation2 + $0x10] sm:$0xff]
    %v79 = vld [vmem:[#allocation2 + $0x18] sm:$0xff]
    %v80 = vld [vmem:[#allocation2 + $0x20] sm:$0xff]
    %v81 = vld [vmem:[#allocation2 + $0x28] sm:$0xff]
    %v82 = vld [vmem:[#allocation2 + $0x30] sm:$0xff]
    %v83 = vld [vmem:[#allocation2 + $0x38] sm:$0xff]
    %v92 = vunpack.c.l.b16 %v76
    %v93 = vunpack.c.h.b16 %v76
    %v94 = vunpack.c.l.b16 %v77
    %v95 = vunpack.c.h.b16 %v77
    %v96 = vunpack.c.l.b16 %v78
    %v97 = vunpack.c.h.b16 %v78
    %v98 = vunpack.c.l.b16 %v79
    %v99 = vunpack.c.h.b16 %v79
    %v100 = vunpack.c.l.b16 %v80
    %v101 = vunpack.c.h.b16 %v80
    %v102 = vunpack.c.l.b16 %v81
    %v103 = vunpack.c.h.b16 %v81
    %v104 = vunpack.c.l.b16 %v82
    %v105 = vunpack.c.h.b16 %v82
    %v106 = vunpack.c.l.b16 %v83
    %v107 = vunpack.c.h.b16 %v83
    %v108 = vpack.c.b16 %v96, %v92
    %v109 = vpack.c.b16 %v97, %v93
    %v110 = vpack.c.b16 %v98, %v94
    %v111 = vpack.c.b16 %v99, %v95
    %v112 = vpack.c.b16 %v104, %v100
    %v113 = vpack.c.b16 %v105, %v101
    %v114 = vpack.c.b16 %v106, %v102
    %v115 = vpack.c.b16 %v107, %v103
    %vm124 = vcmask 261120
    %v126 = vsel %vm124, %v75, 0
    %128 = vmatprep.subr.bf16.mxu0 %v109
    %129 = vmatpush1.bf16.msra.mxu0 %v108
    %130 = vmatprep.subr.bf16.mxu0 %v113
    %131 = vmatpush1.bf16.msra.mxu0 %v112
    %132 = vmatprep.subr.bf16.mxu0 0
    %133 = vmatpush1.bf16.msra.mxu0 0
    %134 = vmatprep.subr.bf16.mxu0 0
    %135 = vmatpush1.bf16.msra.mxu0 0
    %136 = vmatprep.subr.bf16.mxu0 0
    %137 = vmatpush1.bf16.msra.mxu0 0
    %138 = vmatprep.subr.bf16.mxu0 0
    %139 = vmatpush1.bf16.msra.mxu0 0
    %140 = vmatprep.subr.bf16.mxu0 0
    %141 = vmatpush1.bf16.msra.mxu0 0
    %142 = vmatprep.subr.bf16.mxu0 0
    %143 = vmatpush1.bf16.msra.mxu0 0
    %144 = vmatprep.subr.bf16.mxu0 0
    %145 = vmatpush1.bf16.msra.mxu0 0
    %146 = vmatprep.subr.bf16.mxu0 0
    %147 = vmatpush1.bf16.msra.mxu0 0
    %148 = vmatprep.subr.bf16.mxu0 0
    %149 = vmatpush1.bf16.msra.mxu0 0
    %150 = vmatprep.subr.bf16.mxu0 0
    %151 = vmatpush1.bf16.msra.mxu0 0
    %152 = vmatprep.subr.bf16.mxu0 0
    %153 = vmatpush1.bf16.msra.mxu0 0
    %154 = vmatprep.subr.bf16.mxu0 0
    %155 = vmatpush1.bf16.msra.mxu0 0
    %156 = vmatprep.subr.bf16.mxu0 0
    %157 = vmatpush1.bf16.msra.mxu0 0
    %158 = vmatprep.subr.bf16.mxu0 0
    %159 = vmatpush1.bf16.msra.mxu0 0
    %160 = vmatprep.mubr.bf16.mxu0 0
    %161 = vmatmul.mubr.bf16.gmra.mrb[0].mxu0 %v126
    %v162 = vpop.f32.mrb[0].mxu0
    %v163 = vadd.f32 0.0, %v162
    %v164 = vpop.f32.mrb[0].mxu0
    %v165 = vadd.f32 0.0, %v164
    %v166 = vpop.f32.mrb[0].mxu0
    %v167 = vpop.f32.mrb[0].mxu0
    %168 = vdwg.mxu0
    %169 = vmatprep.subr.bf16.mxu0 %v111
    %170 = vmatpush1.bf16.msra.mxu0 %v110
    %171 = vmatprep.subr.bf16.mxu0 %v115
    %172 = vmatpush1.bf16.msra.mxu0 %v114
    %173 = vmatprep.subr.bf16.mxu0 0
    %174 = vmatpush1.bf16.msra.mxu0 0
    %175 = vmatprep.subr.bf16.mxu0 0
    %176 = vmatpush1.bf16.msra.mxu0 0
    %177 = vmatprep.subr.bf16.mxu0 0
    %178 = vmatpush1.bf16.msra.mxu0 0
    %179 = vmatprep.subr.bf16.mxu0 0
    %180 = vmatpush1.bf16.msra.mxu0 0
    %181 = vmatprep.subr.bf16.mxu0 0
    %182 = vmatpush1.bf16.msra.mxu0 0
    %183 = vmatprep.subr.bf16.mxu0 0
    %184 = vmatpush1.bf16.msra.mxu0 0
    %185 = vmatprep.subr.bf16.mxu0 0
    %186 = vmatpush1.bf16.msra.mxu0 0
    %187 = vmatprep.subr.bf16.mxu0 0
    %188 = vmatpush1.bf16.msra.mxu0 0
    %189 = vmatprep.subr.bf16.mxu0 0
    %190 = vmatpush1.bf16.msra.mxu0 0
    %191 = vmatprep.subr.bf16.mxu0 0
    %192 = vmatpush1.bf16.msra.mxu0 0
    %193 = vmatprep.subr.bf16.mxu0 0
    %194 = vmatpush1.bf16.msra.mxu0 0
    %195 = vmatprep.subr.bf16.mxu0 0
    %196 = vmatpush1.bf16.msra.mxu0 0
    %197 = vmatprep.subr.bf16.mxu0 0
    %198 = vmatpush1.bf16.msra.mxu0 0
    %199 = vmatprep.subr.bf16.mxu0 0
    %200 = vmatpush1.bf16.msra.mxu0 0
    %201 = vmatprep.mubr.bf16.mxu0 0
    %202 = vmatmul.mubr.bf16.gmra.mrb[0].mxu0 %v126
    %v203 = vpop.f32.mrb[0].mxu0
    %v204 = vadd.f32 0.0, %v203
    %v205 = vpop.f32.mrb[0].mxu0
    %v206 = vadd.f32 0.0, %v205
    %v207 = vpop.f32.mrb[0].mxu0
    %v208 = vpop.f32.mrb[0].mxu0
    %209 = vdwg.mxu0
    %v210 = vpack.c.bf16 %v163, %v163
    %v211 = vpack.c.bf16 %v165, %v165
    %v212 = vpack.c.bf16 %v204, %v204
    %v213 = vpack.c.bf16 %v206, %v206
    %v214 = vld [vmem:[%s2] sm:$0xf]
    %v217 = vunpack.c.l.s4 1966171168
    %v218 = vunpack.c.0.s8 %v217
    %v219 = vlaneseq
    %v220 = vshrl.u32 %v219, 7
    %v221 = vsub.s32 %v218, %v220
    %v222 = vrot.slane %v214, %v221
    %v223 = vcombine.high %v222, %v222
    %v225 = vunpack.c.l.s4 1966171168
    %v226 = vunpack.c.0.s8 %v225
    %v227 = vlaneseq
    %v228 = vshrl.u32 %v227, 7
    %v229 = vsub.s32 %v226, %v228
    %v230 = vrot.slane %v222, %v229
    %v232 = vunpack.c.l.s4 1966171168
    %v233 = vunpack.c.0.s8 %v232
    %v234 = vlaneseq
    %v235 = vshrl.u32 %v234, 7
    %v236 = vsub.s32 %v233, %v235
    %v237 = vrot.slane %v223, %v236
    %v238 = vcombine.high %v230, %v230
    %v239 = vcombine.high %v237, %v237
    %v241 = vpack.i.b16 %v230, %v230
    %v243 = vlaneseq
    %v244 = vshrl.u32 %v243, 7
    %v245 = vsub.s32 0, %v244
    %v246 = vrot.slane %v241, %v245
    %v248 = vpack.i.b16 %v237, %v237
    %v250 = vlaneseq
    %v251 = vshrl.u32 %v250, 7
    %v252 = vsub.s32 0, %v251
    %v253 = vrot.slane %v248, %v252
    %v255 = vpack.i.b16 %v238, %v238
    %v257 = vlaneseq
    %v258 = vshrl.u32 %v257, 7
    %v259 = vsub.s32 0, %v258
    %v260 = vrot.slane %v255, %v259
    %v262 = vpack.i.b16 %v239, %v239
    %v264 = vlaneseq
    %v265 = vshrl.u32 %v264, 7
    %v266 = vsub.s32 0, %v265
    %v267 = vrot.slane %v262, %v266
    %v268 = vadd.bf16 %v210, %v246
    %v269 = vadd.bf16 %v211, %v253
    %v270 = vadd.bf16 %v212, %v260
    %v271 = vadd.bf16 %v213, %v267
    %v272 = vmax.bf16 %v268, 0
    %v273 = vmax.bf16 %v269, 0
    %v274 = vmax.bf16 %v270, 0
    %v275 = vmax.bf16 %v271, 0
    %v276 = vld [vmem:[#allocation4] sm:$0xff]
    %v277 = vld [vmem:[#allocation4 + $0x8] sm:$0xff]
    %v278 = vld [vmem:[#allocation4 + $0x10] sm:$0xff]
    %v279 = vld [vmem:[#allocation4 + $0x18] sm:$0xff]
    %v280 = vld [vmem:[#allocation4 + $0x20] sm:$0xff]
    %v281 = vld [vmem:[#allocation4 + $0x28] sm:$0xff]
    %v282 = vld [vmem:[#allocation4 + $0x30] sm:$0xff]
    %v283 = vld [vmem:[#allocation4 + $0x38] sm:$0xff]
    %v284 = vld [vmem:[#allocation4 + $0x40] sm:$0xff]
    %v285 = vld [vmem:[#allocation4 + $0x48] sm:$0xff]
    %v286 = vld [vmem:[#allocation4 + $0x50] sm:$0xff]
    %v287 = vld [vmem:[#allocation4 + $0x58] sm:$0xff]
    %v288 = vld [vmem:[#allocation4 + $0x60] sm:$0xff]
    %v289 = vld [vmem:[#allocation4 + $0x68] sm:$0xff]
    %v290 = vld [vmem:[#allocation4 + $0x70] sm:$0xff]
    %v291 = vld [vmem:[#allocation4 + $0x78] sm:$0xff]
    %v292 = vld [vmem:[#allocation4 + $0x80] sm:$0xff]
    %v293 = vld [vmem:[#allocation4 + $0x88] sm:$0xff]
    %v294 = vld [vmem:[#allocation4 + $0x90] sm:$0xff]
    %v295 = vld [vmem:[#allocation4 + $0x98] sm:$0xff]
    %v296 = vld [vmem:[#allocation4 + $0xa0] sm:$0xff]
    %v297 = vld [vmem:[#allocation4 + $0xa8] sm:$0xff]
    %v298 = vld [vmem:[#allocation4 + $0xb0] sm:$0xff]
    %v299 = vld [vmem:[#allocation4 + $0xb8] sm:$0xff]
    %v300 = vld [vmem:[#allocation4 + $0xc0] sm:$0xff]
    %v301 = vld [vmem:[#allocation4 + $0xc8] sm:$0xff]
    %v302 = vld [vmem:[#allocation4 + $0xd0] sm:$0xff]
    %v303 = vld [vmem:[#allocation4 + $0xd8] sm:$0xff]
    %v304 = vld [vmem:[#allocation4 + $0xe0] sm:$0xff]
    %v305 = vld [vmem:[#allocation4 + $0xe8] sm:$0xff]
    %v306 = vld [vmem:[#allocation4 + $0xf0] sm:$0xff]
    %v307 = vld [vmem:[#allocation4 + $0xf8] sm:$0xff]
    %v308 = vld [vmem:[#allocation4 + $0x100] sm:$0xff]
    %v309 = vld [vmem:[#allocation4 + $0x108] sm:$0xff]
    %v310 = vld [vmem:[#allocation4 + $0x110] sm:$0xff]
    %v311 = vld [vmem:[#allocation4 + $0x118] sm:$0xff]
    %v312 = vld [vmem:[#allocation4 + $0x120] sm:$0xff]
    %v313 = vld [vmem:[#allocation4 + $0x128] sm:$0xff]
    %v314 = vld [vmem:[#allocation4 + $0x130] sm:$0xff]
    %v315 = vld [vmem:[#allocation4 + $0x138] sm:$0xff]
    %v316 = vld [vmem:[#allocation4 + $0x140] sm:$0xff]
    %v317 = vld [vmem:[#allocation4 + $0x148] sm:$0xff]
    %v318 = vld [vmem:[#allocation4 + $0x150] sm:$0xff]
    %v319 = vld [vmem:[#allocation4 + $0x158] sm:$0xff]
    %v320 = vld [vmem:[#allocation4 + $0x160] sm:$0xff]
    %v321 = vld [vmem:[#allocation4 + $0x168] sm:$0xff]
    %v322 = vld [vmem:[#allocation4 + $0x170] sm:$0xff]
    %v323 = vld [vmem:[#allocation4 + $0x178] sm:$0xff]
    %v324 = vld [vmem:[#allocation4 + $0x180] sm:$0xff]
    %v325 = vld [vmem:[#allocation4 + $0x188] sm:$0xff]
    %v326 = vld [vmem:[#allocation4 + $0x190] sm:$0xff]
    %v327 = vld [vmem:[#allocation4 + $0x198] sm:$0xff]
    %v328 = vld [vmem:[#allocation4 + $0x1a0] sm:$0xff]
    %v329 = vld [vmem:[#allocation4 + $0x1a8] sm:$0xff]
    %v330 = vld [vmem:[#allocation4 + $0x1b0] sm:$0xff]
    %v331 = vld [vmem:[#allocation4 + $0x1b8] sm:$0xff]
    %v332 = vld [vmem:[#allocation4 + $0x1c0] sm:$0xff]
    %v333 = vld [vmem:[#allocation4 + $0x1c8] sm:$0xff]
    %v334 = vld [vmem:[#allocation4 + $0x1d0] sm:$0xff]
    %v335 = vld [vmem:[#allocation4 + $0x1d8] sm:$0xff]
    %v336 = vld [vmem:[#allocation4 + $0x1e0] sm:$0xff]
    %v337 = vld [vmem:[#allocation4 + $0x1e8] sm:$0xff]
    %v338 = vld [vmem:[#allocation4 + $0x1f0] sm:$0xff]
    %v339 = vld [vmem:[#allocation4 + $0x1f8] sm:$0xff]
    %v340 = vld [vmem:[#allocation4 + $0x200] sm:$0xff]
    %v341 = vld [vmem:[#allocation4 + $0x208] sm:$0xff]
    %v342 = vld [vmem:[#allocation4 + $0x210] sm:$0xff]
    %v343 = vld [vmem:[#allocation4 + $0x218] sm:$0xff]
    %v344 = vld [vmem:[#allocation4 + $0x220] sm:$0xff]
    %v345 = vld [vmem:[#allocation4 + $0x228] sm:$0xff]
    %v346 = vld [vmem:[#allocation4 + $0x230] sm:$0xff]
    %v347 = vld [vmem:[#allocation4 + $0x238] sm:$0xff]
    %v348 = vld [vmem:[#allocation4 + $0x240] sm:$0xff]
    %v349 = vld [vmem:[#allocation4 + $0x248] sm:$0xff]
    %v350 = vld [vmem:[#allocation4 + $0x250] sm:$0xff]
    %v351 = vld [vmem:[#allocation4 + $0x258] sm:$0xff]
    %v352 = vld [vmem:[#allocation4 + $0x260] sm:$0xff]
    %v353 = vld [vmem:[#allocation4 + $0x268] sm:$0xff]
    %v354 = vld [vmem:[#allocation4 + $0x270] sm:$0xff]
    %v355 = vld [vmem:[#allocation4 + $0x278] sm:$0xff]
    %v356 = vld [vmem:[#allocation4 + $0x280] sm:$0xff]
    %v357 = vld [vmem:[#allocation4 + $0x288] sm:$0xff]
    %v358 = vld [vmem:[#allocation4 + $0x290] sm:$0xff]
    %v359 = vld [vmem:[#allocation4 + $0x298] sm:$0xff]
    %v360 = vld [vmem:[#allocation4 + $0x2a0] sm:$0xff]
    %v361 = vld [vmem:[#allocation4 + $0x2a8] sm:$0xff]
    %v362 = vld [vmem:[#allocation4 + $0x2b0] sm:$0xff]
    %v363 = vld [vmem:[#allocation4 + $0x2b8] sm:$0xff]
    %v364 = vld [vmem:[#allocation4 + $0x2c0] sm:$0xff]
    %v365 = vld [vmem:[#allocation4 + $0x2c8] sm:$0xff]
    %v366 = vld [vmem:[#allocation4 + $0x2d0] sm:$0xff]
    %v367 = vld [vmem:[#allocation4 + $0x2d8] sm:$0xff]
    %v368 = vld [vmem:[#allocation4 + $0x2e0] sm:$0xff]
    %v369 = vld [vmem:[#allocation4 + $0x2e8] sm:$0xff]
    %v370 = vld [vmem:[#allocation4 + $0x2f0] sm:$0xff]
    %v371 = vld [vmem:[#allocation4 + $0x2f8] sm:$0xff]
    %v372 = vld [vmem:[#allocation4 + $0x300] sm:$0xff]
    %v373 = vld [vmem:[#allocation4 + $0x308] sm:$0xff]
    %v374 = vld [vmem:[#allocation4 + $0x310] sm:$0xff]
    %v375 = vld [vmem:[#allocation4 + $0x318] sm:$0xff]
    %v376 = vld [vmem:[#allocation4 + $0x320] sm:$0xff]
    %v377 = vld [vmem:[#allocation4 + $0x328] sm:$0xff]
    %v378 = vld [vmem:[#allocation4 + $0x330] sm:$0xff]
    %v379 = vld [vmem:[#allocation4 + $0x338] sm:$0xff]
    %v380 = vld [vmem:[#allocation4 + $0x340] sm:$0xff]
    %v381 = vld [vmem:[#allocation4 + $0x348] sm:$0xff]
    %v382 = vld [vmem:[#allocation4 + $0x350] sm:$0xff]
    %v383 = vld [vmem:[#allocation4 + $0x358] sm:$0xff]
    %v384 = vld [vmem:[#allocation4 + $0x360] sm:$0xff]
    %v385 = vld [vmem:[#allocation4 + $0x368] sm:$0xff]
    %v386 = vld [vmem:[#allocation4 + $0x370] sm:$0xff]
    %v387 = vld [vmem:[#allocation4 + $0x378] sm:$0xff]
    %v388 = vld [vmem:[#allocation4 + $0x380] sm:$0xff]
    %v389 = vld [vmem:[#allocation4 + $0x388] sm:$0xff]
    %v390 = vld [vmem:[#allocation4 + $0x390] sm:$0xff]
    %v391 = vld [vmem:[#allocation4 + $0x398] sm:$0xff]
    %v392 = vld [vmem:[#allocation4 + $0x3a0] sm:$0xff]
    %v393 = vld [vmem:[#allocation4 + $0x3a8] sm:$0xff]
    %v394 = vld [vmem:[#allocation4 + $0x3b0] sm:$0xff]
    %v395 = vld [vmem:[#allocation4 + $0x3b8] sm:$0xff]
    %v396 = vld [vmem:[#allocation4 + $0x3c0] sm:$0xff]
    %v397 = vld [vmem:[#allocation4 + $0x3c8] sm:$0xff]
    %v398 = vld [vmem:[#allocation4 + $0x3d0] sm:$0xff]
    %v399 = vld [vmem:[#allocation4 + $0x3d8] sm:$0xff]
    %v400 = vld [vmem:[#allocation4 + $0x3e0] sm:$0xff]
    %v401 = vld [vmem:[#allocation4 + $0x3e8] sm:$0xff]
    %v402 = vld [vmem:[#allocation4 + $0x3f0] sm:$0xff]
    %v403 = vld [vmem:[#allocation4 + $0x3f8] sm:$0xff]
    %v532 = vunpack.c.l.b16 %v276
    %v533 = vunpack.c.h.b16 %v276
    %v534 = vunpack.c.l.b16 %v277
    %v535 = vunpack.c.h.b16 %v277
    %v536 = vunpack.c.l.b16 %v278
    %v537 = vunpack.c.h.b16 %v278
    %v538 = vunpack.c.l.b16 %v279
    %v539 = vunpack.c.h.b16 %v279
    %v540 = vunpack.c.l.b16 %v280
    %v541 = vunpack.c.h.b16 %v280
    %v542 = vunpack.c.l.b16 %v281
    %v543 = vunpack.c.h.b16 %v281
    %v544 = vunpack.c.l.b16 %v282
    %v545 = vunpack.c.h.b16 %v282
    %v546 = vunpack.c.l.b16 %v283
    %v547 = vunpack.c.h.b16 %v283
    %v548 = vunpack.c.l.b16 %v284
    %v549 = vunpack.c.h.b16 %v284
    %v550 = vunpack.c.l.b16 %v285
    %v551 = vunpack.c.h.b16 %v285
    %v552 = vunpack.c.l.b16 %v286
    %v553 = vunpack.c.h.b16 %v286
    %v554 = vunpack.c.l.b16 %v287
    %v555 = vunpack.c.h.b16 %v287
    %v556 = vunpack.c.l.b16 %v288
    %v557 = vunpack.c.h.b16 %v288
    %v558 = vunpack.c.l.b16 %v289
    %v559 = vunpack.c.h.b16 %v289
    %v560 = vunpack.c.l.b16 %v290
    %v561 = vunpack.c.h.b16 %v290
    %v562 = vunpack.c.l.b16 %v291
    %v563 = vunpack.c.h.b16 %v291
    %v564 = vunpack.c.l.b16 %v292
    %v565 = vunpack.c.h.b16 %v292
    %v566 = vunpack.c.l.b16 %v293
    %v567 = vunpack.c.h.b16 %v293
    %v568 = vunpack.c.l.b16 %v294
    %v569 = vunpack.c.h.b16 %v294
    %v570 = vunpack.c.l.b16 %v295
    %v571 = vunpack.c.h.b16 %v295
    %v572 = vunpack.c.l.b16 %v296
    %v573 = vunpack.c.h.b16 %v296
    %v574 = vunpack.c.l.b16 %v297
    %v575 = vunpack.c.h.b16 %v297
    %v576 = vunpack.c.l.b16 %v298
    %v577 = vunpack.c.h.b16 %v298
    %v578 = vunpack.c.l.b16 %v299
    %v579 = vunpack.c.h.b16 %v299
    %v580 = vunpack.c.l.b16 %v300
    %v581 = vunpack.c.h.b16 %v300
    %v582 = vunpack.c.l.b16 %v301
    %v583 = vunpack.c.h.b16 %v301
    %v584 = vunpack.c.l.b16 %v302
    %v585 = vunpack.c.h.b16 %v302
    %v586 = vunpack.c.l.b16 %v303
    %v587 = vunpack.c.h.b16 %v303
    %v588 = vunpack.c.l.b16 %v304
    %v589 = vunpack.c.h.b16 %v304
    %v590 = vunpack.c.l.b16 %v305
    %v591 = vunpack.c.h.b16 %v305
    %v592 = vunpack.c.l.b16 %v306
    %v593 = vunpack.c.h.b16 %v306
    %v594 = vunpack.c.l.b16 %v307
    %v595 = vunpack.c.h.b16 %v307
    %v596 = vunpack.c.l.b16 %v308
    %v597 = vunpack.c.h.b16 %v308
    %v598 = vunpack.c.l.b16 %v309
    %v599 = vunpack.c.h.b16 %v309
    %v600 = vunpack.c.l.b16 %v310
    %v601 = vunpack.c.h.b16 %v310
    %v602 = vunpack.c.l.b16 %v311
    %v603 = vunpack.c.h.b16 %v311
    %v604 = vunpack.c.l.b16 %v312
    %v605 = vunpack.c.h.b16 %v312
    %v606 = vunpack.c.l.b16 %v313
    %v607 = vunpack.c.h.b16 %v313
    %v608 = vunpack.c.l.b16 %v314
    %v609 = vunpack.c.h.b16 %v314
    %v610 = vunpack.c.l.b16 %v315
    %v611 = vunpack.c.h.b16 %v315
    %v612 = vunpack.c.l.b16 %v316
    %v613 = vunpack.c.h.b16 %v316
    %v614 = vunpack.c.l.b16 %v317
    %v615 = vunpack.c.h.b16 %v317
    %v616 = vunpack.c.l.b16 %v318
    %v617 = vunpack.c.h.b16 %v318
    %v618 = vunpack.c.l.b16 %v319
    %v619 = vunpack.c.h.b16 %v319
    %v620 = vunpack.c.l.b16 %v320
    %v621 = vunpack.c.h.b16 %v320
    %v622 = vunpack.c.l.b16 %v321
    %v623 = vunpack.c.h.b16 %v321
    %v624 = vunpack.c.l.b16 %v322
    %v625 = vunpack.c.h.b16 %v322
    %v626 = vunpack.c.l.b16 %v323
    %v627 = vunpack.c.h.b16 %v323
    %v628 = vunpack.c.l.b16 %v324
    %v629 = vunpack.c.h.b16 %v324
    %v630 = vunpack.c.l.b16 %v325
    %v631 = vunpack.c.h.b16 %v325
    %v632 = vunpack.c.l.b16 %v326
    %v633 = vunpack.c.h.b16 %v326
    %v634 = vunpack.c.l.b16 %v327
    %v635 = vunpack.c.h.b16 %v327
    %v636 = vunpack.c.l.b16 %v328
    %v637 = vunpack.c.h.b16 %v328
    %v638 = vunpack.c.l.b16 %v329
    %v639 = vunpack.c.h.b16 %v329
    %v640 = vunpack.c.l.b16 %v330
    %v641 = vunpack.c.h.b16 %v330
    %v642 = vunpack.c.l.b16 %v331
    %v643 = vunpack.c.h.b16 %v331
    %v644 = vunpack.c.l.b16 %v332
    %v645 = vunpack.c.h.b16 %v332
    %v646 = vunpack.c.l.b16 %v333
    %v647 = vunpack.c.h.b16 %v333
    %v648 = vunpack.c.l.b16 %v334
    %v649 = vunpack.c.h.b16 %v334
    %v650 = vunpack.c.l.b16 %v335
    %v651 = vunpack.c.h.b16 %v335
    %v652 = vunpack.c.l.b16 %v336
    %v653 = vunpack.c.h.b16 %v336
    %v654 = vunpack.c.l.b16 %v337
    %v655 = vunpack.c.h.b16 %v337
    %v656 = vunpack.c.l.b16 %v338
    %v657 = vunpack.c.h.b16 %v338
    %v658 = vunpack.c.l.b16 %v339
    %v659 = vunpack.c.h.b16 %v339
    %v660 = vunpack.c.l.b16 %v340
    %v661 = vunpack.c.h.b16 %v340
    %v662 = vunpack.c.l.b16 %v341
    %v663 = vunpack.c.h.b16 %v341
    %v664 = vunpack.c.l.b16 %v342
    %v665 = vunpack.c.h.b16 %v342
    %v666 = vunpack.c.l.b16 %v343
    %v667 = vunpack.c.h.b16 %v343
    %v668 = vunpack.c.l.b16 %v344
    %v669 = vunpack.c.h.b16 %v344
    %v670 = vunpack.c.l.b16 %v345
    %v671 = vunpack.c.h.b16 %v345
    %v672 = vunpack.c.l.b16 %v346
    %v673 = vunpack.c.h.b16 %v346
    %v674 = vunpack.c.l.b16 %v347
    %v675 = vunpack.c.h.b16 %v347
    %v676 = vunpack.c.l.b16 %v348
    %v677 = vunpack.c.h.b16 %v348
    %v678 = vunpack.c.l.b16 %v349
    %v679 = vunpack.c.h.b16 %v349
    %v680 = vunpack.c.l.b16 %v350
    %v681 = vunpack.c.h.b16 %v350
    %v682 = vunpack.c.l.b16 %v351
    %v683 = vunpack.c.h.b16 %v351
    %v684 = vunpack.c.l.b16 %v352
    %v685 = vunpack.c.h.b16 %v352
    %v686 = vunpack.c.l.b16 %v353
    %v687 = vunpack.c.h.b16 %v353
    %v688 = vunpack.c.l.b16 %v354
    %v689 = vunpack.c.h.b16 %v354
    %v690 = vunpack.c.l.b16 %v355
    %v691 = vunpack.c.h.b16 %v355
    %v692 = vunpack.c.l.b16 %v356
    %v693 = vunpack.c.h.b16 %v356
    %v694 = vunpack.c.l.b16 %v357
    %v695 = vunpack.c.h.b16 %v357
    %v696 = vunpack.c.l.b16 %v358
    %v697 = vunpack.c.h.b16 %v358
    %v698 = vunpack.c.l.b16 %v359
    %v699 = vunpack.c.h.b16 %v359
    %v700 = vunpack.c.l.b16 %v360
    %v701 = vunpack.c.h.b16 %v360
    %v702 = vunpack.c.l.b16 %v361
    %v703 = vunpack.c.h.b16 %v361
    %v704 = vunpack.c.l.b16 %v362
    %v705 = vunpack.c.h.b16 %v362
    %v706 = vunpack.c.l.b16 %v363
    %v707 = vunpack.c.h.b16 %v363
    %v708 = vunpack.c.l.b16 %v364
    %v709 = vunpack.c.h.b16 %v364
    %v710 = vunpack.c.l.b16 %v365
    %v711 = vunpack.c.h.b16 %v365
    %v712 = vunpack.c.l.b16 %v366
    %v713 = vunpack.c.h.b16 %v366
    %v714 = vunpack.c.l.b16 %v367
    %v715 = vunpack.c.h.b16 %v367
    %v716 = vunpack.c.l.b16 %v368
    %v717 = vunpack.c.h.b16 %v368
    %v718 = vunpack.c.l.b16 %v369
    %v719 = vunpack.c.h.b16 %v369
    %v720 = vunpack.c.l.b16 %v370
    %v721 = vunpack.c.h.b16 %v370
    %v722 = vunpack.c.l.b16 %v371
    %v723 = vunpack.c.h.b16 %v371
    %v724 = vunpack.c.l.b16 %v372
    %v725 = vunpack.c.h.b16 %v372
    %v726 = vunpack.c.l.b16 %v373
    %v727 = vunpack.c.h.b16 %v373
    %v728 = vunpack.c.l.b16 %v374
    %v729 = vunpack.c.h.b16 %v374
    %v730 = vunpack.c.l.b16 %v375
    %v731 = vunpack.c.h.b16 %v375
    %v732 = vunpack.c.l.b16 %v376
    %v733 = vunpack.c.h.b16 %v376
    %v734 = vunpack.c.l.b16 %v377
    %v735 = vunpack.c.h.b16 %v377
    %v736 = vunpack.c.l.b16 %v378
    %v737 = vunpack.c.h.b16 %v378
    %v738 = vunpack.c.l.b16 %v379
    %v739 = vunpack.c.h.b16 %v379
    %v740 = vunpack.c.l.b16 %v380
    %v741 = vunpack.c.h.b16 %v380
    %v742 = vunpack.c.l.b16 %v381
    %v743 = vunpack.c.h.b16 %v381
    %v744 = vunpack.c.l.b16 %v382
    %v745 = vunpack.c.h.b16 %v382
    %v746 = vunpack.c.l.b16 %v383
    %v747 = vunpack.c.h.b16 %v383
    %v748 = vunpack.c.l.b16 %v384
    %v749 = vunpack.c.h.b16 %v384
    %v750 = vunpack.c.l.b16 %v385
    %v751 = vunpack.c.h.b16 %v385
    %v752 = vunpack.c.l.b16 %v386
    %v753 = vunpack.c.h.b16 %v386
    %v754 = vunpack.c.l.b16 %v387
    %v755 = vunpack.c.h.b16 %v387
    %v756 = vunpack.c.l.b16 %v388
    %v757 = vunpack.c.h.b16 %v388
    %v758 = vunpack.c.l.b16 %v389
    %v759 = vunpack.c.h.b16 %v389
    %v760 = vunpack.c.l.b16 %v390
    %v761 = vunpack.c.h.b16 %v390
    %v762 = vunpack.c.l.b16 %v391
    %v763 = vunpack.c.h.b16 %v391
    %v764 = vunpack.c.l.b16 %v392
    %v765 = vunpack.c.h.b16 %v392
    %v766 = vunpack.c.l.b16 %v393
    %v767 = vunpack.c.h.b16 %v393
    %v768 = vunpack.c.l.b16 %v394
    %v769 = vunpack.c.h.b16 %v394
    %v770 = vunpack.c.l.b16 %v395
    %v771 = vunpack.c.h.b16 %v395
    %v772 = vunpack.c.l.b16 %v396
    %v773 = vunpack.c.h.b16 %v396
    %v774 = vunpack.c.l.b16 %v397
    %v775 = vunpack.c.h.b16 %v397
    %v776 = vunpack.c.l.b16 %v398
    %v777 = vunpack.c.h.b16 %v398
    %v778 = vunpack.c.l.b16 %v399
    %v779 = vunpack.c.h.b16 %v399
    %v780 = vunpack.c.l.b16 %v400
    %v781 = vunpack.c.h.b16 %v400
    %v782 = vunpack.c.l.b16 %v401
    %v783 = vunpack.c.h.b16 %v401
    %v784 = vunpack.c.l.b16 %v402
    %v785 = vunpack.c.h.b16 %v402
    %v786 = vunpack.c.l.b16 %v403
    %v787 = vunpack.c.h.b16 %v403
    %v788 = vpack.c.b16 %v536, %v532
    %v789 = vpack.c.b16 %v537, %v533
    %v790 = vpack.c.b16 %v538, %v534
    %v791 = vpack.c.b16 %v539, %v535
    %v792 = vpack.c.b16 %v544, %v540
    %v793 = vpack.c.b16 %v545, %v541
    %v794 = vpack.c.b16 %v546, %v542
    %v795 = vpack.c.b16 %v547, %v543
    %v796 = vpack.c.b16 %v552, %v548
    %v797 = vpack.c.b16 %v553, %v549
    %v798 = vpack.c.b16 %v554, %v550
    %v799 = vpack.c.b16 %v555, %v551
    %v800 = vpack.c.b16 %v560, %v556
    %v801 = vpack.c.b16 %v561, %v557
    %v802 = vpack.c.b16 %v562, %v558
    %v803 = vpack.c.b16 %v563, %v559
    %v804 = vpack.c.b16 %v568, %v564
    %v805 = vpack.c.b16 %v569, %v565
    %v806 = vpack.c.b16 %v570, %v566
    %v807 = vpack.c.b16 %v571, %v567
    %v808 = vpack.c.b16 %v576, %v572
    %v809 = vpack.c.b16 %v577, %v573
    %v810 = vpack.c.b16 %v578, %v574
    %v811 = vpack.c.b16 %v579, %v575
    %v812 = vpack.c.b16 %v584, %v580
    %v813 = vpack.c.b16 %v585, %v581
    %v814 = vpack.c.b16 %v586, %v582
    %v815 = vpack.c.b16 %v587, %v583
    %v816 = vpack.c.b16 %v592, %v588
    %v817 = vpack.c.b16 %v593, %v589
    %v818 = vpack.c.b16 %v594, %v590
    %v819 = vpack.c.b16 %v595, %v591
    %v820 = vpack.c.b16 %v600, %v596
    %v821 = vpack.c.b16 %v601, %v597
    %v822 = vpack.c.b16 %v602, %v598
    %v823 = vpack.c.b16 %v603, %v599
    %v824 = vpack.c.b16 %v608, %v604
    %v825 = vpack.c.b16 %v609, %v605
    %v826 = vpack.c.b16 %v610, %v606
    %v827 = vpack.c.b16 %v611, %v607
    %v828 = vpack.c.b16 %v616, %v612
    %v829 = vpack.c.b16 %v617, %v613
    %v830 = vpack.c.b16 %v618, %v614
    %v831 = vpack.c.b16 %v619, %v615
    %v832 = vpack.c.b16 %v624, %v620
    %v833 = vpack.c.b16 %v625, %v621
    %v834 = vpack.c.b16 %v626, %v622
    %v835 = vpack.c.b16 %v627, %v623
    %v836 = vpack.c.b16 %v632, %v628
    %v837 = vpack.c.b16 %v633, %v629
    %v838 = vpack.c.b16 %v634, %v630
    %v839 = vpack.c.b16 %v635, %v631
    %v840 = vpack.c.b16 %v640, %v636
    %v841 = vpack.c.b16 %v641, %v637
    %v842 = vpack.c.b16 %v642, %v638
    %v843 = vpack.c.b16 %v643, %v639
    %v844 = vpack.c.b16 %v648, %v644
    %v845 = vpack.c.b16 %v649, %v645
    %v846 = vpack.c.b16 %v650, %v646
    %v847 = vpack.c.b16 %v651, %v647
    %v848 = vpack.c.b16 %v656, %v652
    %v849 = vpack.c.b16 %v657, %v653
    %v850 = vpack.c.b16 %v658, %v654
    %v851 = vpack.c.b16 %v659, %v655
    %v852 = vpack.c.b16 %v664, %v660
    %v853 = vpack.c.b16 %v665, %v661
    %v854 = vpack.c.b16 %v666, %v662
    %v855 = vpack.c.b16 %v667, %v663
    %v856 = vpack.c.b16 %v672, %v668
    %v857 = vpack.c.b16 %v673, %v669
    %v858 = vpack.c.b16 %v674, %v670
    %v859 = vpack.c.b16 %v675, %v671
    %v860 = vpack.c.b16 %v680, %v676
    %v861 = vpack.c.b16 %v681, %v677
    %v862 = vpack.c.b16 %v682, %v678
    %v863 = vpack.c.b16 %v683, %v679
    %v864 = vpack.c.b16 %v688, %v684
    %v865 = vpack.c.b16 %v689, %v685
    %v866 = vpack.c.b16 %v690, %v686
    %v867 = vpack.c.b16 %v691, %v687
    %v868 = vpack.c.b16 %v696, %v692
    %v869 = vpack.c.b16 %v697, %v693
    %v870 = vpack.c.b16 %v698, %v694
    %v871 = vpack.c.b16 %v699, %v695
    %v872 = vpack.c.b16 %v704, %v700
    %v873 = vpack.c.b16 %v705, %v701
    %v874 = vpack.c.b16 %v706, %v702
    %v875 = vpack.c.b16 %v707, %v703
    %v876 = vpack.c.b16 %v712, %v708
    %v877 = vpack.c.b16 %v713, %v709
    %v878 = vpack.c.b16 %v714, %v710
    %v879 = vpack.c.b16 %v715, %v711
    %v880 = vpack.c.b16 %v720, %v716
    %v881 = vpack.c.b16 %v721, %v717
    %v882 = vpack.c.b16 %v722, %v718
    %v883 = vpack.c.b16 %v723, %v719
    %v884 = vpack.c.b16 %v728, %v724
    %v885 = vpack.c.b16 %v729, %v725
    %v886 = vpack.c.b16 %v730, %v726
    %v887 = vpack.c.b16 %v731, %v727
    %v888 = vpack.c.b16 %v736, %v732
    %v889 = vpack.c.b16 %v737, %v733
    %v890 = vpack.c.b16 %v738, %v734
    %v891 = vpack.c.b16 %v739, %v735
    %v892 = vpack.c.b16 %v744, %v740
    %v893 = vpack.c.b16 %v745, %v741
    %v894 = vpack.c.b16 %v746, %v742
    %v895 = vpack.c.b16 %v747, %v743
    %v896 = vpack.c.b16 %v752, %v748
    %v897 = vpack.c.b16 %v753, %v749
    %v898 = vpack.c.b16 %v754, %v750
    %v899 = vpack.c.b16 %v755, %v751
    %v900 = vpack.c.b16 %v760, %v756
    %v901 = vpack.c.b16 %v761, %v757
    %v902 = vpack.c.b16 %v762, %v758
    %v903 = vpack.c.b16 %v763, %v759
    %v904 = vpack.c.b16 %v768, %v764
    %v905 = vpack.c.b16 %v769, %v765
    %v906 = vpack.c.b16 %v770, %v766
    %v907 = vpack.c.b16 %v771, %v767
    %v908 = vpack.c.b16 %v776, %v772
    %v909 = vpack.c.b16 %v777, %v773
    %v910 = vpack.c.b16 %v778, %v774
    %v911 = vpack.c.b16 %v779, %v775
    %v912 = vpack.c.b16 %v784, %v780
    %v913 = vpack.c.b16 %v785, %v781
    %v914 = vpack.c.b16 %v786, %v782
    %v915 = vpack.c.b16 %v787, %v783
    %1044 = vmatprep.subr.bf16.mxu0 %v789
    %1045 = vmatpush1.bf16.msra.mxu0 %v788
    %1046 = vmatprep.subr.bf16.mxu0 %v793
    %1047 = vmatpush1.bf16.msra.mxu0 %v792
    %1048 = vmatprep.subr.bf16.mxu0 %v797
    %1049 = vmatpush1.bf16.msra.mxu0 %v796
    %1050 = vmatprep.subr.bf16.mxu0 %v801
    %1051 = vmatpush1.bf16.msra.mxu0 %v800
    %1052 = vmatprep.subr.bf16.mxu0 %v805
    %1053 = vmatpush1.bf16.msra.mxu0 %v804
    %1054 = vmatprep.subr.bf16.mxu0 %v809
    %1055 = vmatpush1.bf16.msra.mxu0 %v808
    %1056 = vmatprep.subr.bf16.mxu0 %v813
    %1057 = vmatpush1.bf16.msra.mxu0 %v812
    %1058 = vmatprep.subr.bf16.mxu0 %v817
    %1059 = vmatpush1.bf16.msra.mxu0 %v816
    %1060 = vmatprep.subr.bf16.mxu0 %v821
    %1061 = vmatpush1.bf16.msra.mxu0 %v820
    %1062 = vmatprep.subr.bf16.mxu0 %v825
    %1063 = vmatpush1.bf16.msra.mxu0 %v824
    %1064 = vmatprep.subr.bf16.mxu0 %v829
    %1065 = vmatpush1.bf16.msra.mxu0 %v828
    %1066 = vmatprep.subr.bf16.mxu0 %v833
    %1067 = vmatpush1.bf16.msra.mxu0 %v832
    %1068 = vmatprep.subr.bf16.mxu0 %v837
    %1069 = vmatpush1.bf16.msra.mxu0 %v836
    %1070 = vmatprep.subr.bf16.mxu0 %v841
    %1071 = vmatpush1.bf16.msra.mxu0 %v840
    %1072 = vmatprep.subr.bf16.mxu0 %v845
    %1073 = vmatpush1.bf16.msra.mxu0 %v844
    %1074 = vmatprep.subr.bf16.mxu0 %v849
    %1075 = vmatpush1.bf16.msra.mxu0 %v848
    %1076 = vmatprep.mubr.bf16.mxu0 %v273
    %1077 = vmatmul.mubr.bf16.gmra.mrb[0].mxu0 %v272
    %v1078 = vpop.f32.mrb[0].mxu0
    %v1079 = vadd.f32 0.0, %v1078
    %v1080 = vpop.f32.mrb[0].mxu0
    %v1081 = vadd.f32 0.0, %v1080
    %v1082 = vpop.f32.mrb[0].mxu0
    %v1083 = vpop.f32.mrb[0].mxu0
    %1084 = vdwg.mxu0
    %1085 = vmatprep.subr.bf16.mxu0 %v853
    %1086 = vmatpush1.bf16.msra.mxu0 %v852
    %1087 = vmatprep.subr.bf16.mxu0 %v857
    %1088 = vmatpush1.bf16.msra.mxu0 %v856
    %1089 = vmatprep.subr.bf16.mxu0 %v861
    %1090 = vmatpush1.bf16.msra.mxu0 %v860
    %1091 = vmatprep.subr.bf16.mxu0 %v865
    %1092 = vmatpush1.bf16.msra.mxu0 %v864
    %1093 = vmatprep.subr.bf16.mxu0 %v869
    %1094 = vmatpush1.bf16.msra.mxu0 %v868
    %1095 = vmatprep.subr.bf16.mxu0 %v873
    %1096 = vmatpush1.bf16.msra.mxu0 %v872
    %1097 = vmatprep.subr.bf16.mxu0 %v877
    %1098 = vmatpush1.bf16.msra.mxu0 %v876
    %1099 = vmatprep.subr.bf16.mxu0 %v881
    %1100 = vmatpush1.bf16.msra.mxu0 %v880
    %1101 = vmatprep.subr.bf16.mxu0 %v885
    %1102 = vmatpush1.bf16.msra.mxu0 %v884
    %1103 = vmatprep.subr.bf16.mxu0 %v889
    %1104 = vmatpush1.bf16.msra.mxu0 %v888
    %1105 = vmatprep.subr.bf16.mxu0 %v893
    %1106 = vmatpush1.bf16.msra.mxu0 %v892
    %1107 = vmatprep.subr.bf16.mxu0 %v897
    %1108 = vmatpush1.bf16.msra.mxu0 %v896
    %1109 = vmatprep.subr.bf16.mxu0 %v901
    %1110 = vmatpush1.bf16.msra.mxu0 %v900
    %1111 = vmatprep.subr.bf16.mxu0 %v905
    %1112 = vmatpush1.bf16.msra.mxu0 %v904
    %1113 = vmatprep.subr.bf16.mxu0 %v909
    %1114 = vmatpush1.bf16.msra.mxu0 %v908
    %1115 = vmatprep.subr.bf16.mxu0 %v913
    %1116 = vmatpush1.bf16.msra.mxu0 %v912
    %1117 = vmatprep.mubr.bf16.mxu0 %v275
    %1118 = vmatmul.mubr.bf16.gmra.mrb[0].mxu0 %v274
    %v1119 = vpop.f32.mrb[0].mxu0
    %v1120 = vadd.f32 %v1079, %v1119
    %v1121 = vpop.f32.mrb[0].mxu0
    %v1122 = vadd.f32 %v1081, %v1121
    %v1123 = vpop.f32.mrb[0].mxu0
    %v1124 = vpop.f32.mrb[0].mxu0
    %1125 = vdwg.mxu0
    %1126 = vmatprep.subr.bf16.mxu0 %v791
    %1127 = vmatpush1.bf16.msra.mxu0 %v790
    %1128 = vmatprep.subr.bf16.mxu0 %v795
    %1129 = vmatpush1.bf16.msra.mxu0 %v794
    %1130 = vmatprep.subr.bf16.mxu0 %v799
    %1131 = vmatpush1.bf16.msra.mxu0 %v798
    %1132 = vmatprep.subr.bf16.mxu0 %v803
    %1133 = vmatpush1.bf16.msra.mxu0 %v802
    %1134 = vmatprep.subr.bf16.mxu0 %v807
    %1135 = vmatpush1.bf16.msra.mxu0 %v806
    %1136 = vmatprep.subr.bf16.mxu0 %v811
    %1137 = vmatpush1.bf16.msra.mxu0 %v810
    %1138 = vmatprep.subr.bf16.mxu0 %v815
    %1139 = vmatpush1.bf16.msra.mxu0 %v814
    %1140 = vmatprep.subr.bf16.mxu0 %v819
    %1141 = vmatpush1.bf16.msra.mxu0 %v818
    %1142 = vmatprep.subr.bf16.mxu0 %v823
    %1143 = vmatpush1.bf16.msra.mxu0 %v822
    %1144 = vmatprep.subr.bf16.mxu0 %v827
    %1145 = vmatpush1.bf16.msra.mxu0 %v826
    %1146 = vmatprep.subr.bf16.mxu0 %v831
    %1147 = vmatpush1.bf16.msra.mxu0 %v830
    %1148 = vmatprep.subr.bf16.mxu0 %v835
    %1149 = vmatpush1.bf16.msra.mxu0 %v834
    %1150 = vmatprep.subr.bf16.mxu0 %v839
    %1151 = vmatpush1.bf16.msra.mxu0 %v838
    %1152 = vmatprep.subr.bf16.mxu0 %v843
    %1153 = vmatpush1.bf16.msra.mxu0 %v842
    %1154 = vmatprep.subr.bf16.mxu0 %v847
    %1155 = vmatpush1.bf16.msra.mxu0 %v846
    %1156 = vmatprep.subr.bf16.mxu0 %v851
    %1157 = vmatpush1.bf16.msra.mxu0 %v850
    %1158 = vmatprep.mubr.bf16.mxu0 %v273
    %1159 = vmatmul.mubr.bf16.gmra.mrb[0].mxu0 %v272
    %v1160 = vpop.f32.mrb[0].mxu0
    %v1161 = vadd.f32 0.0, %v1160
    %v1162 = vpop.f32.mrb[0].mxu0
    %v1163 = vadd.f32 0.0, %v1162
    %v1164 = vpop.f32.mrb[0].mxu0
    %v1165 = vpop.f32.mrb[0].mxu0
    %1166 = vdwg.mxu0
    %1167 = vmatprep.subr.bf16.mxu0 %v855
    %1168 = vmatpush1.bf16.msra.mxu0 %v854
    %1169 = vmatprep.subr.bf16.mxu0 %v859
    %1170 = vmatpush1.bf16.msra.mxu0 %v858
    %1171 = vmatprep.subr.bf16.mxu0 %v863
    %1172 = vmatpush1.bf16.msra.mxu0 %v862
    %1173 = vmatprep.subr.bf16.mxu0 %v867
    %1174 = vmatpush1.bf16.msra.mxu0 %v866
    %1175 = vmatprep.subr.bf16.mxu0 %v871
    %1176 = vmatpush1.bf16.msra.mxu0 %v870
    %1177 = vmatprep.subr.bf16.mxu0 %v875
    %1178 = vmatpush1.bf16.msra.mxu0 %v874
    %1179 = vmatprep.subr.bf16.mxu0 %v879
    %1180 = vmatpush1.bf16.msra.mxu0 %v878
    %1181 = vmatprep.subr.bf16.mxu0 %v883
    %1182 = vmatpush1.bf16.msra.mxu0 %v882
    %1183 = vmatprep.subr.bf16.mxu0 %v887
    %1184 = vmatpush1.bf16.msra.mxu0 %v886
    %1185 = vmatprep.subr.bf16.mxu0 %v891
    %1186 = vmatpush1.bf16.msra.mxu0 %v890
    %1187 = vmatprep.subr.bf16.mxu0 %v895
    %1188 = vmatpush1.bf16.msra.mxu0 %v894
    %1189 = vmatprep.subr.bf16.mxu0 %v899
    %1190 = vmatpush1.bf16.msra.mxu0 %v898
    %1191 = vmatprep.subr.bf16.mxu0 %v903
    %1192 = vmatpush1.bf16.msra.mxu0 %v902
    %1193 = vmatprep.subr.bf16.mxu0 %v907
    %1194 = vmatpush1.bf16.msra.mxu0 %v906
    %1195 = vmatprep.subr.bf16.mxu0 %v911
    %1196 = vmatpush1.bf16.msra.mxu0 %v910
    %1197 = vmatprep.subr.bf16.mxu0 %v915
    %1198 = vmatpush1.bf16.msra.mxu0 %v914
    %1199 = vmatprep.mubr.bf16.mxu0 %v275
    %1200 = vmatmul.mubr.bf16.gmra.mrb[0].mxu0 %v274
    %v1201 = vpop.f32.mrb[0].mxu0
    %v1202 = vadd.f32 %v1161, %v1201
    %v1203 = vpop.f32.mrb[0].mxu0
    %v1204 = vadd.f32 %v1163, %v1203
    %v1205 = vpop.f32.mrb[0].mxu0
    %v1206 = vpop.f32.mrb[0].mxu0
    %1207 = vdwg.mxu0
    %v1208 = vpack.c.bf16 %v1120, %v1120
    %v1209 = vpack.c.bf16 %v1122, %v1122
    %v1210 = vpack.c.bf16 %v1202, %v1202
    %v1211 = vpack.c.bf16 %v1204, %v1204
    %v1212 = vld [vmem:[%s4] sm:$0xf]
    %v1215 = vunpack.c.l.s4 1966171168
    %v1216 = vunpack.c.0.s8 %v1215
    %v1217 = vlaneseq
    %v1218 = vshrl.u32 %v1217, 7
    %v1219 = vsub.s32 %v1216, %v1218
    %v1220 = vrot.slane %v1212, %v1219
    %v1221 = vcombine.high %v1220, %v1220
    %v1223 = vunpack.c.l.s4 1966171168
    %v1224 = vunpack.c.0.s8 %v1223
    %v1225 = vlaneseq
    %v1226 = vshrl.u32 %v1225, 7
    %v1227 = vsub.s32 %v1224, %v1226
    %v1228 = vrot.slane %v1220, %v1227
    %v1230 = vunpack.c.l.s4 1966171168
    %v1231 = vunpack.c.0.s8 %v1230
    %v1232 = vlaneseq
    %v1233 = vshrl.u32 %v1232, 7
    %v1234 = vsub.s32 %v1231, %v1233
    %v1235 = vrot.slane %v1221, %v1234
    %v1236 = vcombine.high %v1228, %v1228
    %v1237 = vcombine.high %v1235, %v1235
    %v1239 = vpack.i.b16 %v1228, %v1228
    %v1241 = vlaneseq
    %v1242 = vshrl.u32 %v1241, 7
    %v1243 = vsub.s32 0, %v1242
    %v1244 = vrot.slane %v1239, %v1243
    %v1246 = vpack.i.b16 %v1235, %v1235
    %v1248 = vlaneseq
    %v1249 = vshrl.u32 %v1248, 7
    %v1250 = vsub.s32 0, %v1249
    %v1251 = vrot.slane %v1246, %v1250
    %v1253 = vpack.i.b16 %v1236, %v1236
    %v1255 = vlaneseq
    %v1256 = vshrl.u32 %v1255, 7
    %v1257 = vsub.s32 0, %v1256
    %v1258 = vrot.slane %v1253, %v1257
    %v1260 = vpack.i.b16 %v1237, %v1237
    %v1262 = vlaneseq
    %v1263 = vshrl.u32 %v1262, 7
    %v1264 = vsub.s32 0, %v1263
    %v1265 = vrot.slane %v1260, %v1264
    %v1266 = vadd.bf16 %v1208, %v1244
    %v1267 = vadd.bf16 %v1209, %v1251
    %v1268 = vadd.bf16 %v1210, %v1258
    %v1269 = vadd.bf16 %v1211, %v1265
    %v1270 = vmax.bf16 %v1266, 0
    %v1271 = vmax.bf16 %v1267, 0
    %v1272 = vmax.bf16 %v1268, 0
    %v1273 = vmax.bf16 %v1269, 0
    %v1274 = vld [vmem:[#allocation6] sm:$0xf]
    %v1275 = vld [vmem:[#allocation6 + $0x4] sm:$0xf]
    %v1276 = vld [vmem:[#allocation6 + $0x8] sm:$0xf]
    %v1277 = vld [vmem:[#allocation6 + $0xc] sm:$0xf]
    %v1278 = vld [vmem:[#allocation6 + $0x10] sm:$0xf]
    %v1279 = vld [vmem:[#allocation6 + $0x14] sm:$0xf]
    %v1280 = vld [vmem:[#allocation6 + $0x18] sm:$0xf]
    %v1281 = vld [vmem:[#allocation6 + $0x1c] sm:$0xf]
    %v1282 = vld [vmem:[#allocation6 + $0x20] sm:$0xf]
    %v1283 = vld [vmem:[#allocation6 + $0x24] sm:$0xf]
    %v1284 = vld [vmem:[#allocation6 + $0x28] sm:$0xf]
    %v1285 = vld [vmem:[#allocation6 + $0x2c] sm:$0xf]
    %v1286 = vld [vmem:[#allocation6 + $0x30] sm:$0xf]
    %v1287 = vld [vmem:[#allocation6 + $0x34] sm:$0xf]
    %v1288 = vld [vmem:[#allocation6 + $0x38] sm:$0xf]
    %v1289 = vld [vmem:[#allocation6 + $0x3c] sm:$0xf]
    %v1290 = vld [vmem:[#allocation6 + $0x40] sm:$0xf]
    %v1291 = vld [vmem:[#allocation6 + $0x44] sm:$0xf]
    %v1292 = vld [vmem:[#allocation6 + $0x48] sm:$0xf]
    %v1293 = vld [vmem:[#allocation6 + $0x4c] sm:$0xf]
    %v1294 = vld [vmem:[#allocation6 + $0x50] sm:$0xf]
    %v1295 = vld [vmem:[#allocation6 + $0x54] sm:$0xf]
    %v1296 = vld [vmem:[#allocation6 + $0x58] sm:$0xf]
    %v1297 = vld [vmem:[#allocation6 + $0x5c] sm:$0xf]
    %v1298 = vld [vmem:[#allocation6 + $0x60] sm:$0xf]
    %v1299 = vld [vmem:[#allocation6 + $0x64] sm:$0xf]
    %v1300 = vld [vmem:[#allocation6 + $0x68] sm:$0xf]
    %v1301 = vld [vmem:[#allocation6 + $0x6c] sm:$0xf]
    %v1302 = vld [vmem:[#allocation6 + $0x70] sm:$0xf]
    %v1303 = vld [vmem:[#allocation6 + $0x74] sm:$0xf]
    %v1304 = vld [vmem:[#allocation6 + $0x78] sm:$0xf]
    %v1305 = vld [vmem:[#allocation6 + $0x7c] sm:$0xf]
    %v1306 = vld [vmem:[#allocation6 + $0x80] sm:$0xf]
    %v1307 = vld [vmem:[#allocation6 + $0x84] sm:$0xf]
    %v1308 = vld [vmem:[#allocation6 + $0x88] sm:$0xf]
    %v1309 = vld [vmem:[#allocation6 + $0x8c] sm:$0xf]
    %v1310 = vld [vmem:[#allocation6 + $0x90] sm:$0xf]
    %v1311 = vld [vmem:[#allocation6 + $0x94] sm:$0xf]
    %v1312 = vld [vmem:[#allocation6 + $0x98] sm:$0xf]
    %v1313 = vld [vmem:[#allocation6 + $0x9c] sm:$0xf]
    %v1314 = vld [vmem:[#allocation6 + $0xa0] sm:$0xf]
    %v1315 = vld [vmem:[#allocation6 + $0xa4] sm:$0xf]
    %v1316 = vld [vmem:[#allocation6 + $0xa8] sm:$0xf]
    %v1317 = vld [vmem:[#allocation6 + $0xac] sm:$0xf]
    %v1318 = vld [vmem:[#allocation6 + $0xb0] sm:$0xf]
    %v1319 = vld [vmem:[#allocation6 + $0xb4] sm:$0xf]
    %v1320 = vld [vmem:[#allocation6 + $0xb8] sm:$0xf]
    %v1321 = vld [vmem:[#allocation6 + $0xbc] sm:$0xf]
    %v1322 = vld [vmem:[#allocation6 + $0xc0] sm:$0xf]
    %v1323 = vld [vmem:[#allocation6 + $0xc4] sm:$0xf]
    %v1324 = vld [vmem:[#allocation6 + $0xc8] sm:$0xf]
    %v1325 = vld [vmem:[#allocation6 + $0xcc] sm:$0xf]
    %v1326 = vld [vmem:[#allocation6 + $0xd0] sm:$0xf]
    %v1327 = vld [vmem:[#allocation6 + $0xd4] sm:$0xf]
    %v1328 = vld [vmem:[#allocation6 + $0xd8] sm:$0xf]
    %v1329 = vld [vmem:[#allocation6 + $0xdc] sm:$0xf]
    %v1330 = vld [vmem:[#allocation6 + $0xe0] sm:$0xf]
    %v1331 = vld [vmem:[#allocation6 + $0xe4] sm:$0xf]
    %v1332 = vld [vmem:[#allocation6 + $0xe8] sm:$0xf]
    %v1333 = vld [vmem:[#allocation6 + $0xec] sm:$0xf]
    %v1334 = vld [vmem:[#allocation6 + $0xf0] sm:$0xf]
    %v1335 = vld [vmem:[#allocation6 + $0xf4] sm:$0xf]
    %v1336 = vld [vmem:[#allocation6 + $0xf8] sm:$0xf]
    %v1337 = vld [vmem:[#allocation6 + $0xfc] sm:$0xf]
    %v1338 = vld [vmem:[%s6] sm:$0x1]
    %v1340 = vlaneseq
    %v1341 = vshrl.u32 %v1340, 7
    %v1342 = vsub.s32 0, %v1341
    %v1343 = vrot.slane %v1338, %v1342
    %v1409 = vunpack.c.l.b16 %v1274
    %v1410 = vunpack.c.l.b16 %v1275
    %v1411 = vunpack.c.l.b16 %v1276
    %v1412 = vunpack.c.l.b16 %v1277
    %v1413 = vunpack.c.l.b16 %v1278
    %v1414 = vunpack.c.l.b16 %v1279
    %v1415 = vunpack.c.l.b16 %v1280
    %v1416 = vunpack.c.l.b16 %v1281
    %v1417 = vunpack.c.l.b16 %v1282
    %v1418 = vunpack.c.l.b16 %v1283
    %v1419 = vunpack.c.l.b16 %v1284
    %v1420 = vunpack.c.l.b16 %v1285
    %v1421 = vunpack.c.l.b16 %v1286
    %v1422 = vunpack.c.l.b16 %v1287
    %v1423 = vunpack.c.l.b16 %v1288
    %v1424 = vunpack.c.l.b16 %v1289
    %v1425 = vunpack.c.l.b16 %v1290
    %v1426 = vunpack.c.l.b16 %v1291
    %v1427 = vunpack.c.l.b16 %v1292
    %v1428 = vunpack.c.l.b16 %v1293
    %v1429 = vunpack.c.l.b16 %v1294
    %v1430 = vunpack.c.l.b16 %v1295
    %v1431 = vunpack.c.l.b16 %v1296
    %v1432 = vunpack.c.l.b16 %v1297
    %v1433 = vunpack.c.l.b16 %v1298
    %v1434 = vunpack.c.l.b16 %v1299
    %v1435 = vunpack.c.l.b16 %v1300
    %v1436 = vunpack.c.l.b16 %v1301
    %v1437 = vunpack.c.l.b16 %v1302
    %v1438 = vunpack.c.l.b16 %v1303
    %v1439 = vunpack.c.l.b16 %v1304
    %v1440 = vunpack.c.l.b16 %v1305
    %v1441 = vunpack.c.l.b16 %v1306
    %v1442 = vunpack.c.l.b16 %v1307
    %v1443 = vunpack.c.l.b16 %v1308
    %v1444 = vunpack.c.l.b16 %v1309
    %v1445 = vunpack.c.l.b16 %v1310
    %v1446 = vunpack.c.l.b16 %v1311
    %v1447 = vunpack.c.l.b16 %v1312
    %v1448 = vunpack.c.l.b16 %v1313
    %v1449 = vunpack.c.l.b16 %v1314
    %v1450 = vunpack.c.l.b16 %v1315
    %v1451 = vunpack.c.l.b16 %v1316
    %v1452 = vunpack.c.l.b16 %v1317
    %v1453 = vunpack.c.l.b16 %v1318
    %v1454 = vunpack.c.l.b16 %v1319
    %v1455 = vunpack.c.l.b16 %v1320
    %v1456 = vunpack.c.l.b16 %v1321
    %v1457 = vunpack.c.l.b16 %v1322
    %v1458 = vunpack.c.l.b16 %v1323
    %v1459 = vunpack.c.l.b16 %v1324
    %v1460 = vunpack.c.l.b16 %v1325
    %v1461 = vunpack.c.l.b16 %v1326
    %v1462 = vunpack.c.l.b16 %v1327
    %v1463 = vunpack.c.l.b16 %v1328
    %v1464 = vunpack.c.l.b16 %v1329
    %v1465 = vunpack.c.l.b16 %v1330
    %v1466 = vunpack.c.l.b16 %v1331
    %v1467 = vunpack.c.l.b16 %v1332
    %v1468 = vunpack.c.l.b16 %v1333
    %v1469 = vunpack.c.l.b16 %v1334
    %v1470 = vunpack.c.l.b16 %v1335
    %v1471 = vunpack.c.l.b16 %v1336
    %v1472 = vunpack.c.l.b16 %v1337
    %v1473 = vpack.c.b16 %v1410, %v1409
    %v1474 = vpack.c.b16 %v1412, %v1411
    %v1475 = vpack.c.b16 %v1414, %v1413
    %v1476 = vpack.c.b16 %v1416, %v1415
    %v1477 = vpack.c.b16 %v1418, %v1417
    %v1478 = vpack.c.b16 %v1420, %v1419
    %v1479 = vpack.c.b16 %v1422, %v1421
    %v1480 = vpack.c.b16 %v1424, %v1423
    %v1481 = vpack.c.b16 %v1426, %v1425
    %v1482 = vpack.c.b16 %v1428, %v1427
    %v1483 = vpack.c.b16 %v1430, %v1429
    %v1484 = vpack.c.b16 %v1432, %v1431
    %v1485 = vpack.c.b16 %v1434, %v1433
    %v1486 = vpack.c.b16 %v1436, %v1435
    %v1487 = vpack.c.b16 %v1438, %v1437
    %v1488 = vpack.c.b16 %v1440, %v1439
    %v1489 = vpack.c.b16 %v1442, %v1441
    %v1490 = vpack.c.b16 %v1444, %v1443
    %v1491 = vpack.c.b16 %v1446, %v1445
    %v1492 = vpack.c.b16 %v1448, %v1447
    %v1493 = vpack.c.b16 %v1450, %v1449
    %v1494 = vpack.c.b16 %v1452, %v1451
    %v1495 = vpack.c.b16 %v1454, %v1453
    %v1496 = vpack.c.b16 %v1456, %v1455
    %v1497 = vpack.c.b16 %v1458, %v1457
    %v1498 = vpack.c.b16 %v1460, %v1459
    %v1499 = vpack.c.b16 %v1462, %v1461
    %v1500 = vpack.c.b16 %v1464, %v1463
    %v1501 = vpack.c.b16 %v1466, %v1465
    %v1502 = vpack.c.b16 %v1468, %v1467
    %v1503 = vpack.c.b16 %v1470, %v1469
    %v1504 = vpack.c.b16 %v1472, %v1471
    %1537 = vmatprep.subr.bf16.mxu0 0
    %1538 = vmatpush1.bf16.msra.mxu0 %v1473
    %1539 = vmatprep.subr.bf16.mxu0 0
    %1540 = vmatpush1.bf16.msra.mxu0 %v1474
    %1541 = vmatprep.subr.bf16.mxu0 0
    %1542 = vmatpush1.bf16.msra.mxu0 %v1475
    %1543 = vmatprep.subr.bf16.mxu0 0
    %1544 = vmatpush1.bf16.msra.mxu0 %v1476
    %1545 = vmatprep.subr.bf16.mxu0 0
    %1546 = vmatpush1.bf16.msra.mxu0 %v1477
    %1547 = vmatprep.subr.bf16.mxu0 0
    %1548 = vmatpush1.bf16.msra.mxu0 %v1478
    %1549 = vmatprep.subr.bf16.mxu0 0
    %1550 = vmatpush1.bf16.msra.mxu0 %v1479
    %1551 = vmatprep.subr.bf16.mxu0 0
    %1552 = vmatpush1.bf16.msra.mxu0 %v1480
    %1553 = vmatprep.subr.bf16.mxu0 0
    %1554 = vmatpush1.bf16.msra.mxu0 %v1481
    %1555 = vmatprep.subr.bf16.mxu0 0
    %1556 = vmatpush1.bf16.msra.mxu0 %v1482
    %1557 = vmatprep.subr.bf16.mxu0 0
    %1558 = vmatpush1.bf16.msra.mxu0 %v1483
    %1559 = vmatprep.subr.bf16.mxu0 0
    %1560 = vmatpush1.bf16.msra.mxu0 %v1484
    %1561 = vmatprep.subr.bf16.mxu0 0
    %1562 = vmatpush1.bf16.msra.mxu0 %v1485
    %1563 = vmatprep.subr.bf16.mxu0 0
    %1564 = vmatpush1.bf16.msra.mxu0 %v1486
    %1565 = vmatprep.subr.bf16.mxu0 0
    %1566 = vmatpush1.bf16.msra.mxu0 %v1487
    %1567 = vmatprep.subr.bf16.mxu0 0
    %1568 = vmatpush1.bf16.msra.mxu0 %v1488
    %1569 = vmatprep.mubr.bf16.mxu0 %v1271
    %1570 = vmatmul.mubr.bf16.gmra.mrb[0].mxu0 %v1270
    %v1571 = vpop.f32.mrb[0].mxu0
    %v1572 = vadd.f32 %v1343, %v1571
    %v1573 = vpop.f32.mrb[0].mxu0
    %v1574 = vpop.f32.mrb[0].mxu0
    %v1575 = vpop.f32.mrb[0].mxu0
    %1576 = vdwg.mxu0
    %1577 = vmatprep.subr.bf16.mxu0 0
    %1578 = vmatpush1.bf16.msra.mxu0 %v1489
    %1579 = vmatprep.subr.bf16.mxu0 0
    %1580 = vmatpush1.bf16.msra.mxu0 %v1490
    %1581 = vmatprep.subr.bf16.mxu0 0
    %1582 = vmatpush1.bf16.msra.mxu0 %v1491
    %1583 = vmatprep.subr.bf16.mxu0 0
    %1584 = vmatpush1.bf16.msra.mxu0 %v1492
    %1585 = vmatprep.subr.bf16.mxu0 0
    %1586 = vmatpush1.bf16.msra.mxu0 %v1493
    %1587 = vmatprep.subr.bf16.mxu0 0
    %1588 = vmatpush1.bf16.msra.mxu0 %v1494
    %1589 = vmatprep.subr.bf16.mxu0 0
    %1590 = vmatpush1.bf16.msra.mxu0 %v1495
    %1591 = vmatprep.subr.bf16.mxu0 0
    %1592 = vmatpush1.bf16.msra.mxu0 %v1496
    %1593 = vmatprep.subr.bf16.mxu0 0
    %1594 = vmatpush1.bf16.msra.mxu0 %v1497
    %1595 = vmatprep.subr.bf16.mxu0 0
    %1596 = vmatpush1.bf16.msra.mxu0 %v1498
    %1597 = vmatprep.subr.bf16.mxu0 0
    %1598 = vmatpush1.bf16.msra.mxu0 %v1499
    %1599 = vmatprep.subr.bf16.mxu0 0
    %1600 = vmatpush1.bf16.msra.mxu0 %v1500
    %1601 = vmatprep.subr.bf16.mxu0 0
    %1602 = vmatpush1.bf16.msra.mxu0 %v1501
    %1603 = vmatprep.subr.bf16.mxu0 0
    %1604 = vmatpush1.bf16.msra.mxu0 %v1502
    %1605 = vmatprep.subr.bf16.mxu0 0
    %1606 = vmatpush1.bf16.msra.mxu0 %v1503
    %1607 = vmatprep.subr.bf16.mxu0 0
    %1608 = vmatpush1.bf16.msra.mxu0 %v1504
    %1609 = vmatprep.mubr.bf16.mxu0 %v1273
    %1610 = vmatmul.mubr.bf16.gmra.mrb[0].mxu0 %v1272
    %v1611 = vpop.f32.mrb[0].mxu0
    %v1612 = vadd.f32 %v1572, %v1611
    %v1613 = vpop.f32.mrb[0].mxu0
    %v1614 = vpop.f32.mrb[0].mxu0
    %v1615 = vpop.f32.mrb[0].mxu0
    %1616 = vdwg.mxu0
    %v1617 = vld [vmem:[%s7] sm:$0x1]
    %v1619 = vlaneseq
    %v1620 = vshrl.u32 %v1619, 7
    %v1621 = vsub.s32 0, %v1620
    %v1622 = vrot.slane %v1617, %v1621
    %v1624 = vmax.f32 %v1612, %v1622
    %v1625 = vld [vmem:[%s8] sm:$0x1]
    %v1627 = vlaneseq
    %v1628 = vshrl.u32 %v1627, 7
    %v1629 = vsub.s32 0, %v1628
    %v1630 = vrot.slane %v1625, %v1629
    %v1632 = vmin.f32 %v1624, %v1630
    %1633 = vst [vmem:[%s9] sm:$0xff] %v1632
    // Predicated region
    $region50: #{actor_forward.1} parent=1 // pred_check
      _
    $region51: #{actor_forward.1} parent=1 // pred_check_branch
      %1635 = sbr.rel (0) target = $region53
    $region52: #{actor_forward.1} parent=1 // pred_region
      _
    $region53: #{actor_forward.1} parent=1 // pred_fallthru
      _
    // Predicated region
    $region54: #{actor_forward.1} parent=1 // pred_check
      _
    $region55: #{actor_forward.1} parent=1 // pred_check_branch
      %1637 = sbr.rel (0) target = $region57
    $region56: #{actor_forward.1} parent=1 // pred_region
      _
    $region57: #{actor_forward.1} parent=1 // pred_fallthru
      _
    %1638 = vsyncpa [#allocation3], 1
    %1639 = vsyncpa [#allocation5], 1

</llo_original>
